<compile_context>
chip_gen: v7x
topology: tpu7x:2x2x1
jax: 0.10.0
libtpu: 0.0.40
codegen_flags: <defaults>
</compile_context>

<pallas_src>
import functools

import jax
import jax.numpy as jnp
import numpy as np
from jax.experimental import pallas as pl
from jax.experimental.pallas import tpu as pltpu

LN_EPS = 1e-5


def _layer_norm(v, w, b):
    # fp32 LayerNorm (matches the fp16-safe LayerNorm subclass: compute in f32)
    mu = jnp.mean(v, axis=-1, keepdims=True)
    var = jnp.mean((v - mu) ** 2, axis=-1, keepdims=True)
    return (v - mu) * jax.lax.rsqrt(var + LN_EPS) * w + b


def _block_kernel(x_ref, ln1_w, ln1_b, wqkv_t, bqkv, wo_t, bo,
                  ln2_w, ln2_b, wfc_t, bfc, wproj_t, bproj,
                  o_ref, *, n_head):
    bf16 = jnp.bfloat16
    x = x_ref[0].astype(jnp.float32)                      # (L, E)
    L, E = x.shape
    hd = E // n_head

    # ---- attention branch: ln_1 -> MHA -> residual ----
    h1 = _layer_norm(x, ln1_w[0], ln1_b[0])               # (L, E) f32
    # QKV projection (scale already folded into the Q rows of the weight/bias).
    qkv = jnp.dot(h1.astype(bf16), wqkv_t[...],
                  preferred_element_type=jnp.float32) + bqkv[0]   # (L, 3E) f32
    q = qkv[:, :E].reshape(L, n_head, hd)
    k = qkv[:, E:2 * E].reshape(L, n_head, hd)
    v = qkv[:, 2 * E:].reshape(L, n_head, hd)

    # Batched-head attention (single MXU contraction per stage, no concat).
    s = jnp.einsum("qhd,khd->hqk", q.astype(bf16), k.astype(bf16),
                   preferred_element_type=jnp.float32)    # (H, L, L) f32
    s = s - jnp.max(s, axis=-1, keepdims=True)
    p = jnp.exp(s)
    p = p * pl.reciprocal(jnp.sum(p, axis=-1, keepdims=True), approx=True)
    o = jnp.einsum("hqk,khd->hqd", p.astype(bf16), v.astype(bf16),
                   preferred_element_type=jnp.float32)    # (H, L, hd) f32
    attn = jnp.transpose(o, (1, 0, 2)).reshape(L, E)      # (L, E)
    attn = jnp.dot(attn.astype(bf16), wo_t[...],
                   preferred_element_type=jnp.float32) + bo[0]
    x1 = x + attn                                         # residual in f32

    # ---- MLP branch: ln_2 -> Linear -> QuickGELU -> Linear -> residual ----
    h2 = _layer_norm(x1, ln2_w[0], ln2_b[0])
    fc = jnp.dot(h2.astype(bf16), wfc_t[...],
                 preferred_element_type=jnp.float32) + bfc[0]     # (L, 4E) f32
    g = fc * jax.nn.sigmoid(1.702 * fc)                   # QuickGELU (f32)
    mlp = jnp.dot(g.astype(bf16), wproj_t[...],
                  preferred_element_type=jnp.float32) + bproj[0]

    o_ref[0] = (x1 + mlp).astype(o_ref.dtype)


def prepare_params(params, n_head):
    """One-time layout prep: transpose Linear weights (torch stores (out,in)),
    fold 1/sqrt(hd) into the Q rows of in_proj, reshape biases 2-D, cast the
    matmul weights to bf16.  Do NOT call this per forward pass."""
    E = params["ln1_w"].shape[0]
    hd = E // n_head
    scale = 1.0 / float(np.sqrt(hd))
    qscale = jnp.concatenate([jnp.full((E,), scale, jnp.float32),
                              jnp.ones((2 * E,), jnp.float32)])
    w_in = params["in_proj_weight"].astype(jnp.float32) * qscale[:, None]
    b_in = params["in_proj_bias"].astype(jnp.float32) * qscale
    bf16 = jnp.bfloat16
    f32 = jnp.float32
    return (
        params["ln1_w"].reshape(1, E).astype(f32),
        params["ln1_b"].reshape(1, E).astype(f32),
        w_in.T.astype(bf16),                              # (E, 3E)
        b_in.reshape(1, 3 * E).astype(f32),
        params["out_proj_weight"].T.astype(bf16),         # (E, E)
        params["out_proj_bias"].reshape(1, E).astype(f32),
        params["ln2_w"].reshape(1, E).astype(f32),
        params["ln2_b"].reshape(1, E).astype(f32),
        params["c_fc_weight"].T.astype(bf16),             # (E, 4E)
        params["c_fc_bias"].reshape(1, 4 * E).astype(f32),
        params["c_proj_weight"].T.astype(bf16),           # (4E, E)
        params["c_proj_bias"].reshape(1, E).astype(f32),
    )


def residual_attention_block(x_lne, prepared, n_head):
    """x_lne: (L, N, E) float32. prepared: output of prepare_params()."""
    L, N, E = x_lne.shape
    x = jnp.transpose(x_lne, (1, 0, 2))                   # (N, L, E)

    def full_spec(a):
        nd = a.ndim
        return pl.BlockSpec(a.shape, lambda b, _nd=nd: (0,) * _nd)

    in_specs = [pl.BlockSpec((1, L, E), lambda b: (b, 0, 0))]
    in_specs += [full_spec(a) for a in prepared]

    out = pl.pallas_call(
        functools.partial(_block_kernel, n_head=n_head),
        out_shape=jax.ShapeDtypeStruct((N, L, E), x.dtype),
        grid=(N,),
        in_specs=in_specs,
        out_specs=pl.BlockSpec((1, L, E), lambda b: (b, 0, 0)),
        compiler_params=pltpu.CompilerParams(
            dimension_semantics=("parallel",),
            vmem_limit_bytes=48 * 1024 * 1024),
    )(x, *prepared)
    return jnp.transpose(out, (1, 0, 2))                  # back to (L, N, E)


# ---------------- pure-JAX reference (mirrors torch semantics) ----------------
def ref_block(x_lne, p, n_head):
    L, N, E = x_lne.shape
    hd = E // n_head
    scale = 1.0 / np.sqrt(hd)

    def ln(v, w, b):
        mu = jnp.mean(v, axis=-1, keepdims=True)
        var = jnp.mean((v - mu) ** 2, axis=-1, keepdims=True)
        return (v - mu) / jnp.sqrt(var + LN_EPS) * w + b

    x = x_lne
    h1 = ln(x, p["ln1_w"], p["ln1_b"])
    qkv = h1 @ p["in_proj_weight"].T + p["in_proj_bias"]      # (L, N, 3E)
    q, k, v = jnp.split(qkv, 3, axis=-1)
    q = q.reshape(L, N, n_head, hd).transpose(1, 2, 0, 3) * scale   # (N,H,L,hd)
    k = k.reshape(L, N, n_head, hd).transpose(1, 2, 0, 3)
    v = v.reshape(L, N, n_head, hd).transpose(1, 2, 0, 3)
    s = jnp.einsum("nhqd,nhkd->nhqk", q, k)
    a = jax.nn.softmax(s, axis=-1)
    o = jnp.einsum("nhqk,nhkd->nhqd", a, v)                   # (N,H,L,hd)
    o = o.transpose(2, 0, 1, 3).reshape(L, N, E)
    attn = o @ p["out_proj_weight"].T + p["out_proj_bias"]
    x1 = x + attn
    h2 = ln(x1, p["ln2_w"], p["ln2_b"])
    fc = h2 @ p["c_fc_weight"].T + p["c_fc_bias"]
    g = fc * jax.nn.sigmoid(1.702 * fc)
    mlp = g @ p["c_proj_weight"].T + p["c_proj_bias"]
    return x1 + mlp


if __name__ == "__main__":
    L, N, E, H = 8, 2, 32, 4          # seq, batch, d_model, n_head
    key = jax.random.PRNGKey(0)
    ks = jax.random.split(key, 16)

    def rnd(k, shape, scale=0.02):
        return (scale * jax.random.normal(k, shape)).astype(jnp.float32)

    params = {
        "ln1_w": jnp.ones((E,), jnp.float32),
        "ln1_b": jnp.zeros((E,), jnp.float32),
        "in_proj_weight": rnd(ks[0], (3 * E, E)),
        "in_proj_bias": rnd(ks[1], (3 * E,)),
        "out_proj_weight": rnd(ks[2], (E, E)),
        "out_proj_bias": rnd(ks[3], (E,)),
        "ln2_w": jnp.ones((E,), jnp.float32),
        "ln2_b": jnp.zeros((E,), jnp.float32),
        "c_fc_weight": rnd(ks[4], (4 * E, E)),
        "c_fc_bias": rnd(ks[5], (4 * E,)),
        "c_proj_weight": rnd(ks[6], (E, 4 * E)),
        "c_proj_bias": rnd(ks[7], (E,)),
    }

    x = jax.random.normal(ks[8], (L, N, E), dtype=jnp.float32)

    # one-time weight layout prep (hoisted out of the forward path), jitted fwd
    prepared = jax.block_until_ready(prepare_params(params, H))
    fwd = jax.jit(residual_attention_block, static_argnums=2)

    out = jax.block_until_ready(fwd(x, prepared, H))

    ref = jax.block_until_ready(ref_block(x, params, H))
    # bf16 matmul operands (f32 accumulation) -> loosen tolerance vs f32 ref.
    np.testing.assert_allclose(np.asarray(out), np.asarray(ref),
                               rtol=1e-2, atol=1e-2)
    print("KERNEL_OK")
</pallas_src>

<mosaic_0001>
module attributes {stable_mosaic.version = 11 : i64} {
  func.func @_block_kernel(%arg0: i32, %arg1: memref<1x8x32xf32, #tpu.memory_space<vmem>>, %arg2: memref<1x32xf32, #tpu.memory_space<vmem>>, %arg3: memref<1x32xf32, #tpu.memory_space<vmem>>, %arg4: memref<32x96xbf16, #tpu.memory_space<vmem>>, %arg5: memref<1x96xf32, #tpu.memory_space<vmem>>, %arg6: memref<32x32xbf16, #tpu.memory_space<vmem>>, %arg7: memref<1x32xf32, #tpu.memory_space<vmem>>, %arg8: memref<1x32xf32, #tpu.memory_space<vmem>>, %arg9: memref<1x32xf32, #tpu.memory_space<vmem>>, %arg10: memref<32x128xbf16, #tpu.memory_space<vmem>>, %arg11: memref<1x128xf32, #tpu.memory_space<vmem>>, %arg12: memref<128x32xbf16, #tpu.memory_space<vmem>>, %arg13: memref<1x32xf32, #tpu.memory_space<vmem>>, %arg14: memref<1x8x32xf32, #tpu.memory_space<vmem>>) attributes {dimension_semantics = [#tpu.dimension_semantics<parallel>], iteration_bounds = array<i64: 2>, scalar_prefetch = 0 : i64, scratch_operands = 0 : i64, tpu.core_type = #tpu.core_type<tc>, window_params = [{transform_indices = @transform_0, window_bounds = array<i64: 1, 8, 32>}, {pipeline_mode = #tpu.pipeline_mode<synchronous>, transform_indices = @transform_1, window_bounds = array<i64: 1, 32>}, {pipeline_mode = #tpu.pipeline_mode<synchronous>, transform_indices = @transform_2, window_bounds = array<i64: 1, 32>}, {pipeline_mode = #tpu.pipeline_mode<synchronous>, transform_indices = @transform_3, window_bounds = array<i64: 32, 96>}, {pipeline_mode = #tpu.pipeline_mode<synchronous>, transform_indices = @transform_4, window_bounds = array<i64: 1, 96>}, {pipeline_mode = #tpu.pipeline_mode<synchronous>, transform_indices = @transform_5, window_bounds = array<i64: 32, 32>}, {pipeline_mode = #tpu.pipeline_mode<synchronous>, transform_indices = @transform_6, window_bounds = array<i64: 1, 32>}, {pipeline_mode = #tpu.pipeline_mode<synchronous>, transform_indices = @transform_7, window_bounds = array<i64: 1, 32>}, {pipeline_mode = #tpu.pipeline_mode<synchronous>, transform_indices = @transform_8, window_bounds = array<i64: 1, 32>}, {pipeline_mode = #tpu.pipeline_mode<synchronous>, transform_indices = @transform_9, window_bounds = array<i64: 32, 128>}, {pipeline_mode = #tpu.pipeline_mode<synchronous>, transform_indices = @transform_10, window_bounds = array<i64: 1, 128>}, {pipeline_mode = #tpu.pipeline_mode<synchronous>, transform_indices = @transform_11, window_bounds = array<i64: 128, 32>}, {pipeline_mode = #tpu.pipeline_mode<synchronous>, transform_indices = @transform_12, window_bounds = array<i64: 1, 32>}, {transform_indices = @transform_13, window_bounds = array<i64: 1, 8, 32>}]} {
    %c0 = arith.constant 0 : index
    %c0_0 = arith.constant 0 : index
    %c0_1 = arith.constant 0 : index
    %0 = vector.load %arg1[%c0, %c0_0, %c0_1] : memref<1x8x32xf32, #tpu.memory_space<vmem>>, vector<1x8x32xf32>
    %1 = vector.shape_cast %0 : vector<1x8x32xf32> to vector<8x32xf32>
    %c0_2 = arith.constant 0 : index
    %c0_3 = arith.constant 0 : index
    %2 = vector.load %arg2[%c0_2, %c0_3] : memref<1x32xf32, #tpu.memory_space<vmem>>, vector<1x32xf32>
    %3 = vector.shape_cast %2 : vector<1x32xf32> to vector<32xf32>
    %c0_4 = arith.constant 0 : index
    %c0_5 = arith.constant 0 : index
    %4 = vector.load %arg3[%c0_4, %c0_5] : memref<1x32xf32, #tpu.memory_space<vmem>>, vector<1x32xf32>
    %5 = vector.shape_cast %4 : vector<1x32xf32> to vector<32xf32>
    %cst = arith.constant dense<0.000000e+00> : vector<8xf32>
    %6 = vector.multi_reduction <add>, %1, %cst [1] : vector<8x32xf32> to vector<8xf32>
    %7 = vector.shape_cast %6 : vector<8xf32> to vector<8x1xf32>
    %cst_6 = arith.constant 3.200000e+01 : f32
    %8 = vector.broadcast %cst_6 : f32 to vector<8x1xf32>
    %9 = arith.divf %7, %8 : vector<8x1xf32>
    %10 = vector.broadcast %9 : vector<8x1xf32> to vector<8x32xf32>
    %11 = arith.subf %1, %10 : vector<8x32xf32>
    %12 = arith.mulf %11, %11 : vector<8x32xf32>
    %cst_7 = arith.constant dense<0.000000e+00> : vector<8xf32>
    %13 = vector.multi_reduction <add>, %12, %cst_7 [1] : vector<8x32xf32> to vector<8xf32>
    %14 = vector.shape_cast %13 : vector<8xf32> to vector<8x1xf32>
    %cst_8 = arith.constant 3.200000e+01 : f32
    %15 = vector.broadcast %cst_8 : f32 to vector<8x1xf32>
    %16 = arith.divf %14, %15 : vector<8x1xf32>
    %17 = vector.broadcast %9 : vector<8x1xf32> to vector<8x32xf32>
    %18 = arith.subf %1, %17 : vector<8x32xf32>
    %cst_9 = arith.constant 9.99999974E-6 : f32
    %19 = vector.broadcast %cst_9 : f32 to vector<8x1xf32>
    %20 = arith.addf %16, %19 : vector<8x1xf32>
    %21 = math.rsqrt %20 : vector<8x1xf32>
    %22 = vector.broadcast %21 : vector<8x1xf32> to vector<8x32xf32>
    %23 = arith.mulf %18, %22 : vector<8x32xf32>
    %24 = vector.shape_cast %3 : vector<32xf32> to vector<1x32xf32>
    %25 = vector.broadcast %24 : vector<1x32xf32> to vector<8x32xf32>
    %26 = arith.mulf %23, %25 : vector<8x32xf32>
    %27 = vector.shape_cast %5 : vector<32xf32> to vector<1x32xf32>
    %28 = vector.broadcast %27 : vector<1x32xf32> to vector<8x32xf32>
    %29 = arith.addf %26, %28 : vector<8x32xf32>
    %30 = arith.truncf %29 : vector<8x32xf32> to vector<8x32xbf16>
    %c0_10 = arith.constant 0 : index
    %c0_11 = arith.constant 0 : index
    %31 = vector.load %arg4[%c0_10, %c0_11] : memref<32x96xbf16, #tpu.memory_space<vmem>>, vector<32x96xbf16>
    %cst_12 = arith.constant dense<0.000000e+00> : vector<8x96xf32>
    %32 = tpu.matmul %30, %31, %cst_12 {dimension_numbers = #tpu.dot_dimension_numbers<[1], [0], [0], [1], [0, 0, 1, 1], [], []>} : vector<8x32xbf16>, vector<32x96xbf16>, vector<8x96xf32> -> vector<8x96xf32>
    %c0_13 = arith.constant 0 : index
    %c0_14 = arith.constant 0 : index
    %33 = vector.load %arg5[%c0_13, %c0_14] : memref<1x96xf32, #tpu.memory_space<vmem>>, vector<1x96xf32>
    %34 = vector.shape_cast %33 : vector<1x96xf32> to vector<96xf32>
    %35 = vector.shape_cast %34 : vector<96xf32> to vector<1x96xf32>
    %36 = vector.broadcast %35 : vector<1x96xf32> to vector<8x96xf32>
    %37 = arith.addf %32, %36 : vector<8x96xf32>
    %38 = vector.extract_strided_slice %37 {offsets = [0, 0], sizes = [8, 32], strides = [1, 1]} : vector<8x96xf32> to vector<8x32xf32>
    %39 = vector.shape_cast %38 : vector<8x32xf32> to vector<8x4x8xf32>
    %40 = vector.extract_strided_slice %37 {offsets = [0, 32], sizes = [8, 32], strides = [1, 1]} : vector<8x96xf32> to vector<8x32xf32>
    %41 = vector.shape_cast %40 : vector<8x32xf32> to vector<8x4x8xf32>
    %42 = vector.extract_strided_slice %37 {offsets = [0, 64], sizes = [8, 32], strides = [1, 1]} : vector<8x96xf32> to vector<8x32xf32>
    %43 = vector.shape_cast %42 : vector<8x32xf32> to vector<8x4x8xf32>
    %44 = arith.truncf %39 : vector<8x4x8xf32> to vector<8x4x8xbf16>
    %45 = arith.truncf %41 : vector<8x4x8xf32> to vector<8x4x8xbf16>
    "tpu.trace_start"() <{level = 10 : i32, message = "qhd,khd->hqk"}> : () -> ()
    %cst_15 = arith.constant dense<0.000000e+00> : vector<4x8x8xf32>
    %46 = tpu.matmul %44, %45, %cst_15 {dimension_numbers = #tpu.dot_dimension_numbers<[2], [2], [0], [0], [0, 1, 0, 0, 1, 0], [1], [1]>} : vector<8x4x8xbf16>, vector<8x4x8xbf16>, vector<4x8x8xf32> -> vector<4x8x8xf32>
    "tpu.trace_stop"() : () -> ()
    %cst_16 = arith.constant dense<0xFF800000> : vector<4x8xf32>
    %47 = vector.multi_reduction <maximumf>, %46, %cst_16 [2] : vector<4x8x8xf32> to vector<4x8xf32>
    %48 = vector.shape_cast %47 : vector<4x8xf32> to vector<4x8x1xf32>
    %49 = vector.broadcast %48 : vector<4x8x1xf32> to vector<4x8x8xf32>
    %50 = arith.subf %46, %49 : vector<4x8x8xf32>
    %51 = math.exp %50 : vector<4x8x8xf32>
    %cst_17 = arith.constant dense<0.000000e+00> : vector<4x8xf32>
    %52 = vector.multi_reduction <add>, %51, %cst_17 [2] : vector<4x8x8xf32> to vector<4x8xf32>
    %53 = vector.shape_cast %52 : vector<4x8xf32> to vector<4x8x1xf32>
    %54 = tpu.reciprocal %53 {approx = true} : vector<4x8x1xf32> -> vector<4x8x1xf32>
    %55 = vector.broadcast %54 : vector<4x8x1xf32> to vector<4x8x8xf32>
    %56 = arith.mulf %51, %55 : vector<4x8x8xf32>
    %57 = arith.truncf %56 : vector<4x8x8xf32> to vector<4x8x8xbf16>
    %58 = arith.truncf %43 : vector<8x4x8xf32> to vector<8x4x8xbf16>
    "tpu.trace_start"() <{level = 10 : i32, message = "hqk,khd->hqd"}> : () -> ()
    %cst_18 = arith.constant dense<0.000000e+00> : vector<4x8x8xf32>
    %59 = tpu.matmul %57, %58, %cst_18 {dimension_numbers = #tpu.dot_dimension_numbers<[2], [0], [1], [2], [0, 0, 0, 1, 1, 2], [0], [1]>} : vector<4x8x8xbf16>, vector<8x4x8xbf16>, vector<4x8x8xf32> -> vector<4x8x8xf32>
    "tpu.trace_stop"() : () -> ()
    %60 = tpu.transpose %59, [1, 0, 2] : vector<4x8x8xf32> -> vector<8x4x8xf32>
    %61 = vector.shape_cast %60 : vector<8x4x8xf32> to vector<8x32xf32>
    %62 = arith.truncf %61 : vector<8x32xf32> to vector<8x32xbf16>
    %c0_19 = arith.constant 0 : index
    %c0_20 = arith.constant 0 : index
    %63 = vector.load %arg6[%c0_19, %c0_20] : memref<32x32xbf16, #tpu.memory_space<vmem>>, vector<32x32xbf16>
    %cst_21 = arith.constant dense<0.000000e+00> : vector<8x32xf32>
    %64 = tpu.matmul %62, %63, %cst_21 {dimension_numbers = #tpu.dot_dimension_numbers<[1], [0], [0], [1], [0, 0, 1, 1], [], []>} : vector<8x32xbf16>, vector<32x32xbf16>, vector<8x32xf32> -> vector<8x32xf32>
    %c0_22 = arith.constant 0 : index
    %c0_23 = arith.constant 0 : index
    %65 = vector.load %arg7[%c0_22, %c0_23] : memref<1x32xf32, #tpu.memory_space<vmem>>, vector<1x32xf32>
    %66 = vector.shape_cast %65 : vector<1x32xf32> to vector<32xf32>
    %67 = vector.shape_cast %66 : vector<32xf32> to vector<1x32xf32>
    %68 = vector.broadcast %67 : vector<1x32xf32> to vector<8x32xf32>
    %69 = arith.addf %64, %68 : vector<8x32xf32>
    %70 = arith.addf %1, %69 : vector<8x32xf32>
    %c0_24 = arith.constant 0 : index
    %c0_25 = arith.constant 0 : index
    %71 = vector.load %arg8[%c0_24, %c0_25] : memref<1x32xf32, #tpu.memory_space<vmem>>, vector<1x32xf32>
    %72 = vector.shape_cast %71 : vector<1x32xf32> to vector<32xf32>
    %c0_26 = arith.constant 0 : index
    %c0_27 = arith.constant 0 : index
    %73 = vector.load %arg9[%c0_26, %c0_27] : memref<1x32xf32, #tpu.memory_space<vmem>>, vector<1x32xf32>
    %74 = vector.shape_cast %73 : vector<1x32xf32> to vector<32xf32>
    %cst_28 = arith.constant dense<0.000000e+00> : vector<8xf32>
    %75 = vector.multi_reduction <add>, %70, %cst_28 [1] : vector<8x32xf32> to vector<8xf32>
    %76 = vector.shape_cast %75 : vector<8xf32> to vector<8x1xf32>
    %cst_29 = arith.constant 3.200000e+01 : f32
    %77 = vector.broadcast %cst_29 : f32 to vector<8x1xf32>
    %78 = arith.divf %76, %77 : vector<8x1xf32>
    %79 = vector.broadcast %78 : vector<8x1xf32> to vector<8x32xf32>
    %80 = arith.subf %70, %79 : vector<8x32xf32>
    %81 = arith.mulf %80, %80 : vector<8x32xf32>
    %cst_30 = arith.constant dense<0.000000e+00> : vector<8xf32>
    %82 = vector.multi_reduction <add>, %81, %cst_30 [1] : vector<8x32xf32> to vector<8xf32>
    %83 = vector.shape_cast %82 : vector<8xf32> to vector<8x1xf32>
    %cst_31 = arith.constant 3.200000e+01 : f32
    %84 = vector.broadcast %cst_31 : f32 to vector<8x1xf32>
    %85 = arith.divf %83, %84 : vector<8x1xf32>
    %86 = vector.broadcast %78 : vector<8x1xf32> to vector<8x32xf32>
    %87 = arith.subf %70, %86 : vector<8x32xf32>
    %cst_32 = arith.constant 9.99999974E-6 : f32
    %88 = vector.broadcast %cst_32 : f32 to vector<8x1xf32>
    %89 = arith.addf %85, %88 : vector<8x1xf32>
    %90 = math.rsqrt %89 : vector<8x1xf32>
    %91 = vector.broadcast %90 : vector<8x1xf32> to vector<8x32xf32>
    %92 = arith.mulf %87, %91 : vector<8x32xf32>
    %93 = vector.shape_cast %72 : vector<32xf32> to vector<1x32xf32>
    %94 = vector.broadcast %93 : vector<1x32xf32> to vector<8x32xf32>
    %95 = arith.mulf %92, %94 : vector<8x32xf32>
    %96 = vector.shape_cast %74 : vector<32xf32> to vector<1x32xf32>
    %97 = vector.broadcast %96 : vector<1x32xf32> to vector<8x32xf32>
    %98 = arith.addf %95, %97 : vector<8x32xf32>
    %99 = arith.truncf %98 : vector<8x32xf32> to vector<8x32xbf16>
    %c0_33 = arith.constant 0 : index
    %c0_34 = arith.constant 0 : index
    %100 = vector.load %arg10[%c0_33, %c0_34] : memref<32x128xbf16, #tpu.memory_space<vmem>>, vector<32x128xbf16>
    %cst_35 = arith.constant dense<0.000000e+00> : vector<8x128xf32>
    %101 = tpu.matmul %99, %100, %cst_35 {dimension_numbers = #tpu.dot_dimension_numbers<[1], [0], [0], [1], [0, 0, 1, 1], [], []>} : vector<8x32xbf16>, vector<32x128xbf16>, vector<8x128xf32> -> vector<8x128xf32>
    %c0_36 = arith.constant 0 : index
    %c0_37 = arith.constant 0 : index
    %102 = vector.load %arg11[%c0_36, %c0_37] : memref<1x128xf32, #tpu.memory_space<vmem>>, vector<1x128xf32>
    %103 = vector.shape_cast %102 : vector<1x128xf32> to vector<128xf32>
    %104 = vector.shape_cast %103 : vector<128xf32> to vector<1x128xf32>
    %105 = vector.broadcast %104 : vector<1x128xf32> to vector<8x128xf32>
    %106 = arith.addf %101, %105 : vector<8x128xf32>
    %cst_38 = arith.constant 1.702000e+00 : f32
    %107 = vector.broadcast %cst_38 : f32 to vector<8x128xf32>
    %108 = arith.mulf %107, %106 : vector<8x128xf32>
    %109 = arith.negf %108 : vector<8x128xf32>
    %110 = math.exp %109 : vector<8x128xf32>
    %cst_39 = arith.constant 1.000000e+00 : f32
    %111 = vector.broadcast %cst_39 : f32 to vector<8x128xf32>
    %112 = arith.addf %111, %110 : vector<8x128xf32>
    %113 = arith.divf %111, %112 : vector<8x128xf32>
    %114 = arith.mulf %106, %113 : vector<8x128xf32>
    %115 = arith.truncf %114 : vector<8x128xf32> to vector<8x128xbf16>
    %c0_40 = arith.constant 0 : index
    %c0_41 = arith.constant 0 : index
    %116 = vector.load %arg12[%c0_40, %c0_41] : memref<128x32xbf16, #tpu.memory_space<vmem>>, vector<128x32xbf16>
    %cst_42 = arith.constant dense<0.000000e+00> : vector<8x32xf32>
    %117 = tpu.matmul %115, %116, %cst_42 {dimension_numbers = #tpu.dot_dimension_numbers<[1], [0], [0], [1], [0, 0, 1, 1], [], []>} : vector<8x128xbf16>, vector<128x32xbf16>, vector<8x32xf32> -> vector<8x32xf32>
    %c0_43 = arith.constant 0 : index
    %c0_44 = arith.constant 0 : index
    %118 = vector.load %arg13[%c0_43, %c0_44] : memref<1x32xf32, #tpu.memory_space<vmem>>, vector<1x32xf32>
    %119 = vector.shape_cast %118 : vector<1x32xf32> to vector<32xf32>
    %120 = vector.shape_cast %119 : vector<32xf32> to vector<1x32xf32>
    %121 = vector.broadcast %120 : vector<1x32xf32> to vector<8x32xf32>
    %122 = arith.addf %117, %121 : vector<8x32xf32>
    %123 = arith.addf %70, %122 : vector<8x32xf32>
    %c0_45 = arith.constant 0 : index
    %c0_46 = arith.constant 0 : index
    %c0_47 = arith.constant 0 : index
    %124 = vector.load %arg14[%c0_45, %c0_46, %c0_47] : memref<1x8x32xf32, #tpu.memory_space<vmem>>, vector<1x8x32xf32>
    %125 = vector.shape_cast %124 : vector<1x8x32xf32> to vector<8x32xf32>
    %126 = vector.shape_cast %123 : vector<8x32xf32> to vector<1x8x32xf32>
    tpu.vector_store %arg14[%c0_45, %c0_46, %c0_47], %126 {strides = array<i32>} : memref<1x8x32xf32, #tpu.memory_space<vmem>>, vector<1x8x32xf32>,
    return
  }
  func.func @transform_0(%arg0: i32) -> (i32, i32, i32) {
    %c0_i32 = arith.constant 0 : i32
    %c0_i32_0 = arith.constant 0 : i32
    %c0_i32_1 = arith.constant 0 : i32
    return %arg0, %c0_i32, %c0_i32_0 : i32, i32, i32
  }
  func.func @transform_1(%arg0: i32) -> (i32, i32) {
    %c0_i32 = arith.constant 0 : i32
    %c0_i32_0 = arith.constant 0 : i32
    %c0_i32_1 = arith.constant 0 : i32
    return %c0_i32, %c0_i32_0 : i32, i32
  }
  func.func @transform_2(%arg0: i32) -> (i32, i32) {
    %c0_i32 = arith.constant 0 : i32
    %c0_i32_0 = arith.constant 0 : i32
    %c0_i32_1 = arith.constant 0 : i32
    return %c0_i32, %c0_i32_0 : i32, i32
  }
  func.func @transform_3(%arg0: i32) -> (i32, i32) {
    %c0_i32 = arith.constant 0 : i32
    %c0_i32_0 = arith.constant 0 : i32
    %c0_i32_1 = arith.constant 0 : i32
    return %c0_i32, %c0_i32_0 : i32, i32
  }
  func.func @transform_4(%arg0: i32) -> (i32, i32) {
    %c0_i32 = arith.constant 0 : i32
    %c0_i32_0 = arith.constant 0 : i32
    %c0_i32_1 = arith.constant 0 : i32
    return %c0_i32, %c0_i32_0 : i32, i32
  }
  func.func @transform_5(%arg0: i32) -> (i32, i32) {
    %c0_i32 = arith.constant 0 : i32
    %c0_i32_0 = arith.constant 0 : i32
    %c0_i32_1 = arith.constant 0 : i32
    return %c0_i32, %c0_i32_0 : i32, i32
  }
  func.func @transform_6(%arg0: i32) -> (i32, i32) {
    %c0_i32 = arith.constant 0 : i32
    %c0_i32_0 = arith.constant 0 : i32
    %c0_i32_1 = arith.constant 0 : i32
    return %c0_i32, %c0_i32_0 : i32, i32
  }
  func.func @transform_7(%arg0: i32) -> (i32, i32) {
    %c0_i32 = arith.constant 0 : i32
    %c0_i32_0 = arith.constant 0 : i32
    %c0_i32_1 = arith.constant 0 : i32
    return %c0_i32, %c0_i32_0 : i32, i32
  }
  func.func @transform_8(%arg0: i32) -> (i32, i32) {
    %c0_i32 = arith.constant 0 : i32
    %c0_i32_0 = arith.constant 0 : i32
    %c0_i32_1 = arith.constant 0 : i32
    return %c0_i32, %c0_i32_0 : i32, i32
  }
  func.func @transform_9(%arg0: i32) -> (i32, i32) {
    %c0_i32 = arith.constant 0 : i32
    %c0_i32_0 = arith.constant 0 : i32
    %c0_i32_1 = arith.constant 0 : i32
    return %c0_i32, %c0_i32_0 : i32, i32
  }
  func.func @transform_10(%arg0: i32) -> (i32, i32) {
    %c0_i32 = arith.constant 0 : i32
    %c0_i32_0 = arith.constant 0 : i32
    %c0_i32_1 = arith.constant 0 : i32
    return %c0_i32, %c0_i32_0 : i32, i32
  }
  func.func @transform_11(%arg0: i32) -> (i32, i32) {
    %c0_i32 = arith.constant 0 : i32
    %c0_i32_0 = arith.constant 0 : i32
    %c0_i32_1 = arith.constant 0 : i32
    return %c0_i32, %c0_i32_0 : i32, i32
  }
  func.func @transform_12(%arg0: i32) -> (i32, i32) {
    %c0_i32 = arith.constant 0 : i32
    %c0_i32_0 = arith.constant 0 : i32
    %c0_i32_1 = arith.constant 0 : i32
    return %c0_i32, %c0_i32_0 : i32, i32
  }
  func.func @transform_13(%arg0: i32) -> (i32, i32, i32) {
    %c0_i32 = arith.constant 0 : i32
    %c0_i32_0 = arith.constant 0 : i32
    %c0_i32_1 = arith.constant 0 : i32
    return %arg0, %c0_i32, %c0_i32_0 : i32, i32, i32
  }
}

</mosaic_0001>

<llo_original>
// kernel: residual_attention_block.1
$region0: #{residual_attention_block.1}
  #allocation0 [shape = 'u32[]', space=smem, size = 0x4, offset = 0x4, fixed_abs, tag = 'smem constant byte address 0x4 - core index']
  #allocation1 [shape = 'u32[144,128]{1,0:T(1,128)}', space=vmem, size = 0x12000, scoped, tag = 'internal scratch']
  %s0 = inlined_call_operand.vmem [shape: f32[2,8,32], index: 0, kind: input, shape index: {}]
  %s1 = inlined_call_operand.vmem [shape: f32[1,32], index: 1, kind: input, shape index: {}]
  %s2 = inlined_call_operand.vmem [shape: f32[1,32], index: 2, kind: input, shape index: {}]
  %s3 = inlined_call_operand.vmem [shape: bf16[32,96], index: 3, kind: input, shape index: {}]
  %s4 = inlined_call_operand.vmem [shape: f32[1,96], index: 4, kind: input, shape index: {}]
  %s5 = inlined_call_operand.vmem [shape: bf16[32,32], index: 5, kind: input, shape index: {}]
  %s6 = inlined_call_operand.vmem [shape: f32[1,32], index: 6, kind: input, shape index: {}]
  %s7 = inlined_call_operand.vmem [shape: f32[1,32], index: 7, kind: input, shape index: {}]
  %s8 = inlined_call_operand.vmem [shape: f32[1,32], index: 8, kind: input, shape index: {}]
  %s9 = inlined_call_operand.vmem [shape: bf16[32,128], index: 9, kind: input, shape index: {}]
  %s10 = inlined_call_operand.vmem [shape: f32[1,128], index: 10, kind: input, shape index: {}]
  %s11 = inlined_call_operand.vmem [shape: bf16[128,32], index: 11, kind: input, shape index: {}]
  %s12 = inlined_call_operand.vmem [shape: f32[1,32], index: 12, kind: input, shape index: {}]
  %s13 = inlined_call_operand.vmem [shape: f32[2,8,32], index: 13, kind: output, shape index: {}]
  %s14 = sld [smem:[#allocation0]]
  $region85: #{residual_attention_block.1} parent=0
    _
  %s16 = ssub.s32 1, %s14
  %s17 = scalar_select 0, %s16, %s14
  loop: start=0, step=1, limit=4
  $region2: #{residual_attention_block.1} parent=0 // loop_pre_header
    _
  $region3: #{residual_attention_block.1} parent=0 // loop_header
    %s19 = sphi 0, %s23
    %p20 = scmp.ge.s32.totalorder %s19, 4
    %s29 = sphi 0, %s31
    %s32 = sphi 0, %s29
    %s33 = sphi 0, %s32
    %s49 = sphi 0, %s33
    %s53 = sphi 0, %s53
    %s55 = sphi 0, %s53
    %s56 = sphi 0, %s55
    %s70 = sphi 0, %s56
    %s74 = sphi 0, %s74
    %s76 = sphi 0, %s74
    %s77 = sphi 0, %s76
    %s91 = sphi 0, %s77
    %s95 = sphi 0, %s95
    %s97 = sphi 0, %s95
    %s98 = sphi 0, %s97
    %s112 = sphi 0, %s98
    %s116 = sphi 0, %s116
    %s118 = sphi 0, %s116
    %s119 = sphi 0, %s118
    %s133 = sphi 0, %s119
    %s137 = sphi 0, %s137
    %s139 = sphi 0, %s137
    %s140 = sphi 0, %s139
    %s154 = sphi 0, %s140
    %s158 = sphi 0, %s158
    %s160 = sphi 0, %s158
    %s161 = sphi 0, %s160
    %s175 = sphi 0, %s161
    %s179 = sphi 0, %s179
    %s181 = sphi 0, %s179
    %s182 = sphi 0, %s181
    %s196 = sphi 0, %s182
    %s200 = sphi 0, %s200
    %s202 = sphi 0, %s200
    %s203 = sphi 0, %s202
    %s217 = sphi 0, %s203
    %s221 = sphi 0, %s221
    %s223 = sphi 0, %s221
    %s224 = sphi 0, %s223
    %s238 = sphi 0, %s224
    %s242 = sphi 0, %s242
    %s244 = sphi 0, %s242
    %s245 = sphi 0, %s244
    %s259 = sphi 0, %s245
    %s263 = sphi 0, %s263
    %s265 = sphi 0, %s263
    %s266 = sphi 0, %s265
    %s280 = sphi 0, %s266
    %s284 = sphi 0, %s284
    %s286 = sphi 0, %s284
    %s287 = sphi 0, %s286
    %s301 = sphi 0, %s287
    %s307 = sphi 0, %s309
    %s310 = sphi 0, %s307
    %s311 = sphi 0, %s310
    %s327 = sphi 0, %s311
  $region4: #{residual_attention_block.1} parent=0 // loop_header_branch
    %22 = sbr.rel (%p20) target = $region8
  $region5: #{residual_attention_block.1} parent=0 // loop_body
    %s24 = ssub.s32 %s19, 1
    %s25 = ssub.s32 %s19, 2
    %s26 = sadd.s32 %s19, 1
    %s27 = ssub.s32 %s19, %s26
    %p28 = scmp.eq.s32.totalorder %s27, 0
    %s30 = sadd.s32 %s29, 1
    %s31 = scalar_select %p28, %s29, %s30
    %p34 = pneg %p28
    %p35 = scmp.eq.s32.totalorder %s19, 1
    %p36 = por %p34, %p35
    %p37 = scmp.ne.s32.totalorder %s29, %s32
    %p38 = scmp.eq.s32.totalorder %s19, 0
    %p39 = por %p37, %p38
    %p40 = scmp.ne.s32.totalorder %s29, %s32
    %p41 = scmp.eq.s32.totalorder %s24, 1
    %p42 = por %p40, %p41
    %p43 = scmp.ne.s32.totalorder %s32, %s33
    %p44 = scmp.eq.s32.totalorder %s24, 0
    %p45 = por %p43, %p44
    %p46 = scmp.ne.s32.totalorder %s32, %s33
    %p47 = scmp.eq.s32.totalorder %s25, 1
    %p48 = por %p46, %p47
    %p50 = scmp.ne.s32.totalorder %s33, %s49
    %p51 = scmp.eq.s32.totalorder %s25, 0
    %p52 = por %p50, %p51
    %s54 = sadd.s32 %s53, 1
    %p57 = scmp.eq.s32.totalorder %s19, 1
    %p58 = scmp.ne.s32.totalorder %s53, %s55
    %p59 = scmp.eq.s32.totalorder %s19, 0
    %p60 = por %p58, %p59
    %p61 = scmp.ne.s32.totalorder %s53, %s55
    %p62 = scmp.eq.s32.totalorder %s24, 1
    %p63 = por %p61, %p62
    %p64 = scmp.ne.s32.totalorder %s55, %s56
    %p65 = scmp.eq.s32.totalorder %s24, 0
    %p66 = por %p64, %p65
    %p67 = scmp.ne.s32.totalorder %s55, %s56
    %p68 = scmp.eq.s32.totalorder %s25, 1
    %p69 = por %p67, %p68
    %p71 = scmp.ne.s32.totalorder %s56, %s70
    %p72 = scmp.eq.s32.totalorder %s25, 0
    %p73 = por %p71, %p72
    %s75 = sadd.s32 %s74, 1
    %p78 = scmp.eq.s32.totalorder %s19, 1
    %p79 = scmp.ne.s32.totalorder %s74, %s76
    %p80 = scmp.eq.s32.totalorder %s19, 0
    %p81 = por %p79, %p80
    %p82 = scmp.ne.s32.totalorder %s74, %s76
    %p83 = scmp.eq.s32.totalorder %s24, 1
    %p84 = por %p82, %p83
    %p85 = scmp.ne.s32.totalorder %s76, %s77
    %p86 = scmp.eq.s32.totalorder %s24, 0
    %p87 = por %p85, %p86
    %p88 = scmp.ne.s32.totalorder %s76, %s77
    %p89 = scmp.eq.s32.totalorder %s25, 1
    %p90 = por %p88, %p89
    %p92 = scmp.ne.s32.totalorder %s77, %s91
    %p93 = scmp.eq.s32.totalorder %s25, 0
    %p94 = por %p92, %p93
    %s96 = sadd.s32 %s95, 1
    %p99 = scmp.eq.s32.totalorder %s19, 1
    %p100 = scmp.ne.s32.totalorder %s95, %s97
    %p101 = scmp.eq.s32.totalorder %s19, 0
    %p102 = por %p100, %p101
    %p103 = scmp.ne.s32.totalorder %s95, %s97
    %p104 = scmp.eq.s32.totalorder %s24, 1
    %p105 = por %p103, %p104
    %p106 = scmp.ne.s32.totalorder %s97, %s98
    %p107 = scmp.eq.s32.totalorder %s24, 0
    %p108 = por %p106, %p107
    %p109 = scmp.ne.s32.totalorder %s97, %s98
    %p110 = scmp.eq.s32.totalorder %s25, 1
    %p111 = por %p109, %p110
    %p113 = scmp.ne.s32.totalorder %s98, %s112
    %p114 = scmp.eq.s32.totalorder %s25, 0
    %p115 = por %p113, %p114
    %s117 = sadd.s32 %s116, 1
    %p120 = scmp.eq.s32.totalorder %s19, 1
    %p121 = scmp.ne.s32.totalorder %s116, %s118
    %p122 = scmp.eq.s32.totalorder %s19, 0
    %p123 = por %p121, %p122
    %p124 = scmp.ne.s32.totalorder %s116, %s118
    %p125 = scmp.eq.s32.totalorder %s24, 1
    %p126 = por %p124, %p125
    %p127 = scmp.ne.s32.totalorder %s118, %s119
    %p128 = scmp.eq.s32.totalorder %s24, 0
    %p129 = por %p127, %p128
    %p130 = scmp.ne.s32.totalorder %s118, %s119
    %p131 = scmp.eq.s32.totalorder %s25, 1
    %p132 = por %p130, %p131
    %p134 = scmp.ne.s32.totalorder %s119, %s133
    %p135 = scmp.eq.s32.totalorder %s25, 0
    %p136 = por %p134, %p135
    %s138 = sadd.s32 %s137, 1
    %p141 = scmp.eq.s32.totalorder %s19, 1
    %p142 = scmp.ne.s32.totalorder %s137, %s139
    %p143 = scmp.eq.s32.totalorder %s19, 0
    %p144 = por %p142, %p143
    %p145 = scmp.ne.s32.totalorder %s137, %s139
    %p146 = scmp.eq.s32.totalorder %s24, 1
    %p147 = por %p145, %p146
    %p148 = scmp.ne.s32.totalorder %s139, %s140
    %p149 = scmp.eq.s32.totalorder %s24, 0
    %p150 = por %p148, %p149
    %p151 = scmp.ne.s32.totalorder %s139, %s140
    %p152 = scmp.eq.s32.totalorder %s25, 1
    %p153 = por %p151, %p152
    %p155 = scmp.ne.s32.totalorder %s140, %s154
    %p156 = scmp.eq.s32.totalorder %s25, 0
    %p157 = por %p155, %p156
    %s159 = sadd.s32 %s158, 1
    %p162 = scmp.eq.s32.totalorder %s19, 1
    %p163 = scmp.ne.s32.totalorder %s158, %s160
    %p164 = scmp.eq.s32.totalorder %s19, 0
    %p165 = por %p163, %p164
    %p166 = scmp.ne.s32.totalorder %s158, %s160
    %p167 = scmp.eq.s32.totalorder %s24, 1
    %p168 = por %p166, %p167
    %p169 = scmp.ne.s32.totalorder %s160, %s161
    %p170 = scmp.eq.s32.totalorder %s24, 0
    %p171 = por %p169, %p170
    %p172 = scmp.ne.s32.totalorder %s160, %s161
    %p173 = scmp.eq.s32.totalorder %s25, 1
    %p174 = por %p172, %p173
    %p176 = scmp.ne.s32.totalorder %s161, %s175
    %p177 = scmp.eq.s32.totalorder %s25, 0
    %p178 = por %p176, %p177
    %s180 = sadd.s32 %s179, 1
    %p183 = scmp.eq.s32.totalorder %s19, 1
    %p184 = scmp.ne.s32.totalorder %s179, %s181
    %p185 = scmp.eq.s32.totalorder %s19, 0
    %p186 = por %p184, %p185
    %p187 = scmp.ne.s32.totalorder %s179, %s181
    %p188 = scmp.eq.s32.totalorder %s24, 1
    %p189 = por %p187, %p188
    %p190 = scmp.ne.s32.totalorder %s181, %s182
    %p191 = scmp.eq.s32.totalorder %s24, 0
    %p192 = por %p190, %p191
    %p193 = scmp.ne.s32.totalorder %s181, %s182
    %p194 = scmp.eq.s32.totalorder %s25, 1
    %p195 = por %p193, %p194
    %p197 = scmp.ne.s32.totalorder %s182, %s196
    %p198 = scmp.eq.s32.totalorder %s25, 0
    %p199 = por %p197, %p198
    %s201 = sadd.s32 %s200, 1
    %p204 = scmp.eq.s32.totalorder %s19, 1
    %p205 = scmp.ne.s32.totalorder %s200, %s202
    %p206 = scmp.eq.s32.totalorder %s19, 0
    %p207 = por %p205, %p206
    %p208 = scmp.ne.s32.totalorder %s200, %s202
    %p209 = scmp.eq.s32.totalorder %s24, 1
    %p210 = por %p208, %p209
    %p211 = scmp.ne.s32.totalorder %s202, %s203
    %p212 = scmp.eq.s32.totalorder %s24, 0
    %p213 = por %p211, %p212
    %p214 = scmp.ne.s32.totalorder %s202, %s203
    %p215 = scmp.eq.s32.totalorder %s25, 1
    %p216 = por %p214, %p215
    %p218 = scmp.ne.s32.totalorder %s203, %s217
    %p219 = scmp.eq.s32.totalorder %s25, 0
    %p220 = por %p218, %p219
    %s222 = sadd.s32 %s221, 1
    %p225 = scmp.eq.s32.totalorder %s19, 1
    %p226 = scmp.ne.s32.totalorder %s221, %s223
    %p227 = scmp.eq.s32.totalorder %s19, 0
    %p228 = por %p226, %p227
    %p229 = scmp.ne.s32.totalorder %s221, %s223
    %p230 = scmp.eq.s32.totalorder %s24, 1
    %p231 = por %p229, %p230
    %p232 = scmp.ne.s32.totalorder %s223, %s224
    %p233 = scmp.eq.s32.totalorder %s24, 0
    %p234 = por %p232, %p233
    %p235 = scmp.ne.s32.totalorder %s223, %s224
    %p236 = scmp.eq.s32.totalorder %s25, 1
    %p237 = por %p235, %p236
    %p239 = scmp.ne.s32.totalorder %s224, %s238
    %p240 = scmp.eq.s32.totalorder %s25, 0
    %p241 = por %p239, %p240
    %s243 = sadd.s32 %s242, 1
    %p246 = scmp.eq.s32.totalorder %s19, 1
    %p247 = scmp.ne.s32.totalorder %s242, %s244
    %p248 = scmp.eq.s32.totalorder %s19, 0
    %p249 = por %p247, %p248
    %p250 = scmp.ne.s32.totalorder %s242, %s244
    %p251 = scmp.eq.s32.totalorder %s24, 1
    %p252 = por %p250, %p251
    %p253 = scmp.ne.s32.totalorder %s244, %s245
    %p254 = scmp.eq.s32.totalorder %s24, 0
    %p255 = por %p253, %p254
    %p256 = scmp.ne.s32.totalorder %s244, %s245
    %p257 = scmp.eq.s32.totalorder %s25, 1
    %p258 = por %p256, %p257
    %p260 = scmp.ne.s32.totalorder %s245, %s259
    %p261 = scmp.eq.s32.totalorder %s25, 0
    %p262 = por %p260, %p261
    %s264 = sadd.s32 %s263, 1
    %p267 = scmp.eq.s32.totalorder %s19, 1
    %p268 = scmp.ne.s32.totalorder %s263, %s265
    %p269 = scmp.eq.s32.totalorder %s19, 0
    %p270 = por %p268, %p269
    %p271 = scmp.ne.s32.totalorder %s263, %s265
    %p272 = scmp.eq.s32.totalorder %s24, 1
    %p273 = por %p271, %p272
    %p274 = scmp.ne.s32.totalorder %s265, %s266
    %p275 = scmp.eq.s32.totalorder %s24, 0
    %p276 = por %p274, %p275
    %p277 = scmp.ne.s32.totalorder %s265, %s266
    %p278 = scmp.eq.s32.totalorder %s25, 1
    %p279 = por %p277, %p278
    %p281 = scmp.ne.s32.totalorder %s266, %s280
    %p282 = scmp.eq.s32.totalorder %s25, 0
    %p283 = por %p281, %p282
    %s285 = sadd.s32 %s284, 1
    %p288 = scmp.eq.s32.totalorder %s19, 1
    %p289 = scmp.ne.s32.totalorder %s284, %s286
    %p290 = scmp.eq.s32.totalorder %s19, 0
    %p291 = por %p289, %p290
    %p292 = scmp.ne.s32.totalorder %s284, %s286
    %p293 = scmp.eq.s32.totalorder %s24, 1
    %p294 = por %p292, %p293
    %p295 = scmp.ne.s32.totalorder %s286, %s287
    %p296 = scmp.eq.s32.totalorder %s24, 0
    %p297 = por %p295, %p296
    %p298 = scmp.ne.s32.totalorder %s286, %s287
    %p299 = scmp.eq.s32.totalorder %s25, 1
    %p300 = por %p298, %p299
    %p302 = scmp.ne.s32.totalorder %s287, %s301
    %p303 = scmp.eq.s32.totalorder %s25, 0
    %p304 = por %p302, %p303
    %s305 = ssub.s32 %s19, %s26
    %p306 = scmp.eq.s32.totalorder %s305, 0
    %s308 = sadd.s32 %s307, 1
    %s309 = scalar_select %p306, %s307, %s308
    %p312 = pneg %p306
    %p313 = scmp.eq.s32.totalorder %s19, 1
    %p314 = por %p312, %p313
    %p315 = scmp.ne.s32.totalorder %s307, %s310
    %p316 = scmp.eq.s32.totalorder %s19, 0
    %p317 = por %p315, %p316
    %p318 = scmp.ne.s32.totalorder %s307, %s310
    %p319 = scmp.eq.s32.totalorder %s24, 1
    %p320 = por %p318, %p319
    %p321 = scmp.ne.s32.totalorder %s310, %s311
    %p322 = scmp.eq.s32.totalorder %s24, 0
    %p323 = por %p321, %p322
    %p324 = scmp.ne.s32.totalorder %s310, %s311
    %p325 = scmp.eq.s32.totalorder %s25, 1
    %p326 = por %p324, %p325
    %p328 = scmp.ne.s32.totalorder %s311, %s327
    %p329 = scmp.eq.s32.totalorder %s25, 0
    %p330 = por %p328, %p329
    %p331 = scmp.le.s32.totalorder 1, %s19
    %p332 = scmp.lt.s32.totalorder %s19, 3
    %p333 = pnand %p331, %p332
    %p334 = pneg %p333
    // Predicated region
    $region9: #{residual_attention_block.1} parent=5 // pred_check
      _
    $region10: #{residual_attention_block.1} parent=5 // pred_check_branch
      %336 = sbr.rel (%p333) target = $region12
    $region11: #{residual_attention_block.1} parent=5 // pred_region
      %s337 = ssub.s32 %s19, 1
      // Predicated region
      $region13: #{residual_attention_block.1} parent=11 // pred_check
        %p338 = pneg %p66
      $region14: #{residual_attention_block.1} parent=11 // pred_check_branch
        %340 = sbr.rel (%p338) target = $region16
      $region15: #{residual_attention_block.1} parent=11 // pred_region
        _
      $region16: #{residual_attention_block.1} parent=11 // pred_fallthru
        _
      // Predicated region
      $region17: #{residual_attention_block.1} parent=11 // pred_check
        %p341 = pneg %p87
      $region18: #{residual_attention_block.1} parent=11 // pred_check_branch
        %343 = sbr.rel (%p341) target = $region20
      $region19: #{residual_attention_block.1} parent=11 // pred_region
        _
      $region20: #{residual_attention_block.1} parent=11 // pred_fallthru
        _
      // Predicated region
      $region21: #{residual_attention_block.1} parent=11 // pred_check
        %p344 = pneg %p108
      $region22: #{residual_attention_block.1} parent=11 // pred_check_branch
        %346 = sbr.rel (%p344) target = $region24
      $region23: #{residual_attention_block.1} parent=11 // pred_region
        _
      $region24: #{residual_attention_block.1} parent=11 // pred_fallthru
        _
      // Predicated region
      $region25: #{residual_attention_block.1} parent=11 // pred_check
        %p347 = pneg %p129
      $region26: #{residual_attention_block.1} parent=11 // pred_check_branch
        %349 = sbr.rel (%p347) target = $region28
      $region27: #{residual_attention_block.1} parent=11 // pred_region
        _
      $region28: #{residual_attention_block.1} parent=11 // pred_fallthru
        _
      // Predicated region
      $region29: #{residual_attention_block.1} parent=11 // pred_check
        %p350 = pneg %p150
      $region30: #{residual_attention_block.1} parent=11 // pred_check_branch
        %352 = sbr.rel (%p350) target = $region32
      $region31: #{residual_attention_block.1} parent=11 // pred_region
        _
      $region32: #{residual_attention_block.1} parent=11 // pred_fallthru
        _
      // Predicated region
      $region33: #{residual_attention_block.1} parent=11 // pred_check
        %p353 = pneg %p171
      $region34: #{residual_attention_block.1} parent=11 // pred_check_branch
        %355 = sbr.rel (%p353) target = $region36
      $region35: #{residual_attention_block.1} parent=11 // pred_region
        _
      $region36: #{residual_attention_block.1} parent=11 // pred_fallthru
        _
      // Predicated region
      $region37: #{residual_attention_block.1} parent=11 // pred_check
        %p356 = pneg %p192
      $region38: #{residual_attention_block.1} parent=11 // pred_check_branch
        %358 = sbr.rel (%p356) target = $region40
      $region39: #{residual_attention_block.1} parent=11 // pred_region
        _
      $region40: #{residual_attention_block.1} parent=11 // pred_fallthru
        _
      // Predicated region
      $region41: #{residual_attention_block.1} parent=11 // pred_check
        %p359 = pneg %p213
      $region42: #{residual_attention_block.1} parent=11 // pred_check_branch
        %361 = sbr.rel (%p359) target = $region44
      $region43: #{residual_attention_block.1} parent=11 // pred_region
        _
      $region44: #{residual_attention_block.1} parent=11 // pred_fallthru
        _
      // Predicated region
      $region45: #{residual_attention_block.1} parent=11 // pred_check
        %p362 = pneg %p234
      $region46: #{residual_attention_block.1} parent=11 // pred_check_branch
        %364 = sbr.rel (%p362) target = $region48
      $region47: #{residual_attention_block.1} parent=11 // pred_region
        _
      $region48: #{residual_attention_block.1} parent=11 // pred_fallthru
        _
      // Predicated region
      $region49: #{residual_attention_block.1} parent=11 // pred_check
        %p365 = pneg %p255
      $region50: #{residual_attention_block.1} parent=11 // pred_check_branch
        %367 = sbr.rel (%p365) target = $region52
      $region51: #{residual_attention_block.1} parent=11 // pred_region
        _
      $region52: #{residual_attention_block.1} parent=11 // pred_fallthru
        _
      // Predicated region
      $region53: #{residual_attention_block.1} parent=11 // pred_check
        %p368 = pneg %p276
      $region54: #{residual_attention_block.1} parent=11 // pred_check_branch
        %370 = sbr.rel (%p368) target = $region56
      $region55: #{residual_attention_block.1} parent=11 // pred_region
        _
      $region56: #{residual_attention_block.1} parent=11 // pred_fallthru
        _
      // Predicated region
      $region57: #{residual_attention_block.1} parent=11 // pred_check
        %p371 = pneg %p297
      $region58: #{residual_attention_block.1} parent=11 // pred_check_branch
        %373 = sbr.rel (%p371) target = $region60
      $region59: #{residual_attention_block.1} parent=11 // pred_region
        _
      $region60: #{residual_attention_block.1} parent=11 // pred_fallthru
        _
    $region12: #{residual_attention_block.1} parent=5 // pred_fallthru
      _
    %p374 = scmp.lt.s32.totalorder %s19, 2
    // Predicated region
    $region61: #{residual_attention_block.1} parent=5 // pred_check
      %p375 = pneg %p374
    $region62: #{residual_attention_block.1} parent=5 // pred_check_branch
      %377 = sbr.rel (%p375) target = $region64
    $region63: #{residual_attention_block.1} parent=5 // pred_region
      // Predicated region
      $region65: #{residual_attention_block.1} parent=63 // pred_check
        %p378 = pneg %p39
      $region66: #{residual_attention_block.1} parent=63 // pred_check_branch
        %380 = sbr.rel (%p378) target = $region68
      $region67: #{residual_attention_block.1} parent=63 // pred_region
        %p381 = scmp.lt.s32.totalorder %s19, 1
        %s382 = scalar_select %p381, %s19, 1
        %s383 = smul.addr %s382, 8
        %s384 = scalar_lea.vmem %s0, %s383
      $region68: #{residual_attention_block.1} parent=63 // pred_fallthru
        _
    $region64: #{residual_attention_block.1} parent=5 // pred_fallthru
      _
    %p385 = scmp.le.s32.totalorder 1, %s19
    %p386 = scmp.lt.s32.totalorder %s19, 3
    %p387 = pnand %p385, %p386
    %p388 = pneg %p387
    // Predicated region
    $region69: #{residual_attention_block.1} parent=5 // pred_check
      _
    $region70: #{residual_attention_block.1} parent=5 // pred_check_branch
      %390 = sbr.rel (%p387) target = $region72
    $region71: #{residual_attention_block.1} parent=5 // pred_region
      %s391 = ssub.s32 %s19, 1
      %p392 = scmp.lt.s32.totalorder %s24, 1
      %s393 = scalar_select %p392, %s24, 1
      %s394 = smul.addr %s393, 8
      %s395 = scalar_lea.vmem %s0, %s394
      %p396 = pneg %p45
      %p397 = pneg %p42
      %p398 = pneg %p66
      %p399 = pneg %p63
      %p400 = pneg %p87
      %p401 = pneg %p84
      %p402 = pneg %p108
      %p403 = pneg %p105
      %p404 = pneg %p129
      %p405 = pneg %p126
      %p406 = pneg %p150
      %p407 = pneg %p147
      %p408 = pneg %p171
      %p409 = pneg %p168
      %p410 = pneg %p192
      %p411 = pneg %p189
      %p412 = pneg %p213
      %p413 = pneg %p210
      %p414 = pneg %p234
      %p415 = pneg %p231
      %p416 = pneg %p255
      %p417 = pneg %p252
      %p418 = pneg %p276
      %p419 = pneg %p273
      %p420 = pneg %p297
      %p421 = pneg %p294
      %p422 = pneg %p323
      %p423 = pneg %p320
      %p424 = scmp.lt.s32.totalorder %s24, 1
      %s425 = scalar_select %p424, %s24, 1
      %s426 = smul.addr %s425, 8
      %s427 = scalar_lea.vmem %s13, %s426
      %p428 = scmp.lt.s32.totalorder %s24, 1
      %s429 = scalar_select %p428, %s24, 1
      %s430 = smul.addr %s429, 8
      %s431 = scalar_lea.vmem %s0, %s430
      %p432 = scmp.lt.s32.totalorder %s24, 1
      %s433 = scalar_select %p432, %s24, 1
      %s434 = smul.addr %s433, 8
      %s435 = scalar_lea.vmem %s13, %s434
      %v437 = vld [vmem:[%s431] sm:$0xff]
      %v438 = vld [vmem:[%s1] sm:$0x1]
      %v439 = vld [vmem:[%s2] sm:$0x1]
      %vm440 = vcmask 261120
      %v441 = vsel %vm440, %v437, 0.0
      %442 = vadd.xlane.f32.xlu0 %v441
      %v443 = vpop.xlane.xlu0 %442
      %v444 = vrcp.pop 32.0
      %v445 = vmul.f32 %v443, %v444
      %v446 = vsub.f32 %v437, %v445
      %v447 = vmul.f32 %v446, %v446
      %v448 = vsel %vm440, %v447, 0.0
      %449 = vadd.xlane.f32.xlu0 %v448
      %v450 = vpop.xlane.xlu0 %449
      %v451 = vmul.f32 %v450, %v444
      %v452 = vadd.f32 %v451, 1e-05
      %v453 = vrsqrt.pop %v452
      %v454 = vmul.f32 %v446, %v453
      %v456 = vlaneseq
      %v457 = vshrl.u32 %v456, 7
      %v458 = vsub.s32 0, %v457
      %v459 = vrot.slane %v438, %v458
      %v461 = vmul.f32 %v454, %v459
      %v463 = vlaneseq
      %v464 = vshrl.u32 %v463, 7
      %v465 = vsub.s32 0, %v464
      %v466 = vrot.slane %v439, %v465
      %v468 = vadd.f32 %v461, %v466
      %v469 = vpack.c.bf16 %v468, %v468
      %v470 = vld [vmem:[%s3] sm:$0xf]
      %v471 = vld [vmem:[%s3 + $0x4] sm:$0xf]
      %v472 = vld [vmem:[%s3 + $0x8] sm:$0xf]
      %v473 = vld [vmem:[%s3 + $0xc] sm:$0xf]
      %v474 = vld [vmem:[%s4] sm:$0x1]
      %v476 = vlaneseq
      %v477 = vshrl.u32 %v476, 7
      %v478 = vsub.s32 0, %v477
      %v479 = vrot.slane %v474, %v478
      %v485 = vunpack.c.l.b16 %v470
      %v486 = vunpack.c.l.b16 %v471
      %v487 = vunpack.c.l.b16 %v472
      %v488 = vunpack.c.l.b16 %v473
      %v489 = vpack.c.b16 %v486, %v485
      %v490 = vpack.c.b16 %v488, %v487
      %v494 = vsel %vm440, %v469, 0
      %496 = vmatprep.subr.bf16.mxu0 0
      %497 = vmatpush1.bf16.msra.mxu0 %v489
      %498 = vmatprep.subr.bf16.mxu0 0
      %499 = vmatpush1.bf16.msra.mxu0 %v490
      %500 = vmatprep.subr.bf16.mxu0 0
      %501 = vmatpush1.bf16.msra.mxu0 0
      %502 = vmatprep.subr.bf16.mxu0 0
      %503 = vmatpush1.bf16.msra.mxu0 0
      %504 = vmatprep.subr.bf16.mxu0 0
      %505 = vmatpush1.bf16.msra.mxu0 0
      %506 = vmatprep.subr.bf16.mxu0 0
      %507 = vmatpush1.bf16.msra.mxu0 0
      %508 = vmatprep.subr.bf16.mxu0 0
      %509 = vmatpush1.bf16.msra.mxu0 0
      %510 = vmatprep.subr.bf16.mxu0 0
      %511 = vmatpush1.bf16.msra.mxu0 0
      %512 = vmatprep.subr.bf16.mxu0 0
      %513 = vmatpush1.bf16.msra.mxu0 0
      %514 = vmatprep.subr.bf16.mxu0 0
      %515 = vmatpush1.bf16.msra.mxu0 0
      %516 = vmatprep.subr.bf16.mxu0 0
      %517 = vmatpush1.bf16.msra.mxu0 0
      %518 = vmatprep.subr.bf16.mxu0 0
      %519 = vmatpush1.bf16.msra.mxu0 0
      %520 = vmatprep.subr.bf16.mxu0 0
      %521 = vmatpush1.bf16.msra.mxu0 0
      %522 = vmatprep.subr.bf16.mxu0 0
      %523 = vmatpush1.bf16.msra.mxu0 0
      %524 = vmatprep.subr.bf16.mxu0 0
      %525 = vmatpush1.bf16.msra.mxu0 0
      %526 = vmatprep.subr.bf16.mxu0 0
      %527 = vmatpush1.bf16.msra.mxu0 0
      %528 = vmatprep.mubr.bf16.mxu0 0
      %529 = vmatmul.mubr.bf16.gmra.mrb[0].mxu0 %v494
      %v530 = vpop.f32.mrb[0].mxu0
      %v531 = vadd.f32 %v479, %v530
      %v532 = vpop.f32.mrb[0].mxu0
      %v533 = vpop.f32.mrb[0].mxu0
      %v534 = vpop.f32.mrb[0].mxu0
      %535 = vdwg.mxu0
      %537 = vrot.lane.b32.xlu0 %v531, 120
      %v538 = vpop.permute.xlu0 %537
      %540 = vrot.lane.b32.xlu0 %v531, 112
      %v541 = vpop.permute.xlu0 %540
      %543 = vrot.lane.b32.xlu0 %v531, 104
      %v544 = vpop.permute.xlu0 %543
      %v546 = vcombine.low %v531, %v541
      %v547 = vcombine.high %v531, %v541
      %v549 = vunpack.c.l.s4 1983009808
      %v550 = vunpack.c.0.s8 %v549
      %v551 = vlaneseq
      %v552 = vshrl.u32 %v551, 7
      %v553 = vsub.s32 %v550, %v552
      %v554 = vrot.slane %v546, %v553
      %v556 = vunpack.c.l.s4 1983009808
      %v557 = vunpack.c.0.s8 %v556
      %v558 = vlaneseq
      %v559 = vshrl.u32 %v558, 7
      %v560 = vsub.s32 %v557, %v559
      %v561 = vrot.slane %v547, %v560
      %v562 = vcombine.low %v538, %v544
      %v563 = vcombine.high %v538, %v544
      %v565 = vunpack.c.l.s4 1983009808
      %v566 = vunpack.c.0.s8 %v565
      %v567 = vlaneseq
      %v568 = vshrl.u32 %v567, 7
      %v569 = vsub.s32 %v566, %v568
      %v570 = vrot.slane %v562, %v569
      %v572 = vunpack.c.l.s4 1983009808
      %v573 = vunpack.c.0.s8 %v572
      %v574 = vlaneseq
      %v575 = vshrl.u32 %v574, 7
      %v576 = vsub.s32 %v573, %v575
      %v577 = vrot.slane %v563, %v576
      %v578 = vcombine.low %v554, %v570
      %v579 = vcombine.high %v554, %v570
      %v581 = vunpack.c.l.s4 1934713408
      %v582 = vunpack.c.0.s8 %v581
      %v583 = vlaneseq
      %v584 = vshrl.u32 %v583, 7
      %v585 = vsub.s32 %v582, %v584
      %v586 = vrot.slane %v578, %v585
      %v588 = vunpack.c.l.s4 1934713408
      %v589 = vunpack.c.0.s8 %v588
      %v590 = vlaneseq
      %v591 = vshrl.u32 %v590, 7
      %v592 = vsub.s32 %v589, %v591
      %v593 = vrot.slane %v579, %v592
      %v594 = vcombine.low %v561, %v577
      %v595 = vcombine.high %v561, %v577
      %v597 = vunpack.c.l.s4 1934713408
      %v598 = vunpack.c.0.s8 %v597
      %v599 = vlaneseq
      %v600 = vshrl.u32 %v599, 7
      %v601 = vsub.s32 %v598, %v600
      %v602 = vrot.slane %v594, %v601
      %v604 = vunpack.c.l.s4 1934713408
      %v605 = vunpack.c.0.s8 %v604
      %v606 = vlaneseq
      %v607 = vshrl.u32 %v606, 7
      %v608 = vsub.s32 %v605, %v607
      %v609 = vrot.slane %v595, %v608
      %v610 = vcombine.high %v586, 0.0
      %v611 = vcombine.high %v593, 0.0
      %v612 = vcombine.high %v602, 0.0
      %v613 = vcombine.high %v609, 0.0
      %614 = vrot.lane.b32.xlu0 %v531, 96
      %v615 = vpop.permute.xlu0 %614
      %616 = vrot.lane.b32.xlu0 %v538, 96
      %v617 = vpop.permute.xlu0 %616
      %618 = vrot.lane.b32.xlu0 %v541, 96
      %v619 = vpop.permute.xlu0 %618
      %620 = vrot.lane.b32.xlu0 %v544, 96
      %v621 = vpop.permute.xlu0 %620
      %v626 = vcombine.low %v615, %v619
      %v627 = vcombine.high %v615, %v619
      %v629 = vunpack.c.l.s4 1983009808
      %v630 = vunpack.c.0.s8 %v629
      %v631 = vlaneseq
      %v632 = vshrl.u32 %v631, 7
      %v633 = vsub.s32 %v630, %v632
      %v634 = vrot.slane %v626, %v633
      %v636 = vunpack.c.l.s4 1983009808
      %v637 = vunpack.c.0.s8 %v636
      %v638 = vlaneseq
      %v639 = vshrl.u32 %v638, 7
      %v640 = vsub.s32 %v637, %v639
      %v641 = vrot.slane %v627, %v640
      %v642 = vcombine.low %v617, %v621
      %v643 = vcombine.high %v617, %v621
      %v645 = vunpack.c.l.s4 1983009808
      %v646 = vunpack.c.0.s8 %v645
      %v647 = vlaneseq
      %v648 = vshrl.u32 %v647, 7
      %v649 = vsub.s32 %v646, %v648
      %v650 = vrot.slane %v642, %v649
      %v652 = vunpack.c.l.s4 1983009808
      %v653 = vunpack.c.0.s8 %v652
      %v654 = vlaneseq
      %v655 = vshrl.u32 %v654, 7
      %v656 = vsub.s32 %v653, %v655
      %v657 = vrot.slane %v643, %v656
      %v658 = vcombine.low %v634, %v650
      %v659 = vcombine.high %v634, %v650
      %v661 = vunpack.c.l.s4 1934713408
      %v662 = vunpack.c.0.s8 %v661
      %v663 = vlaneseq
      %v664 = vshrl.u32 %v663, 7
      %v665 = vsub.s32 %v662, %v664
      %v666 = vrot.slane %v658, %v665
      %v668 = vunpack.c.l.s4 1934713408
      %v669 = vunpack.c.0.s8 %v668
      %v670 = vlaneseq
      %v671 = vshrl.u32 %v670, 7
      %v672 = vsub.s32 %v669, %v671
      %v673 = vrot.slane %v659, %v672
      %v674 = vcombine.low %v641, %v657
      %v675 = vcombine.high %v641, %v657
      %v677 = vunpack.c.l.s4 1934713408
      %v678 = vunpack.c.0.s8 %v677
      %v679 = vlaneseq
      %v680 = vshrl.u32 %v679, 7
      %v681 = vsub.s32 %v678, %v680
      %v682 = vrot.slane %v674, %v681
      %v684 = vunpack.c.l.s4 1934713408
      %v685 = vunpack.c.0.s8 %v684
      %v686 = vlaneseq
      %v687 = vshrl.u32 %v686, 7
      %v688 = vsub.s32 %v685, %v687
      %v689 = vrot.slane %v675, %v688
      %v690 = vcombine.high %v666, 0.0
      %v691 = vcombine.high %v673, 0.0
      %v692 = vcombine.high %v682, 0.0
      %v693 = vcombine.high %v689, 0.0
      %694 = vrot.lane.b32.xlu0 %v531, 64
      %v695 = vpop.permute.xlu0 %694
      %696 = vrot.lane.b32.xlu0 %v538, 64
      %v697 = vpop.permute.xlu0 %696
      %698 = vrot.lane.b32.xlu0 %v541, 64
      %v699 = vpop.permute.xlu0 %698
      %700 = vrot.lane.b32.xlu0 %v544, 64
      %v701 = vpop.permute.xlu0 %700
      %v706 = vcombine.low %v695, %v699
      %v707 = vcombine.high %v695, %v699
      %v709 = vunpack.c.l.s4 1983009808
      %v710 = vunpack.c.0.s8 %v709
      %v711 = vlaneseq
      %v712 = vshrl.u32 %v711, 7
      %v713 = vsub.s32 %v710, %v712
      %v714 = vrot.slane %v706, %v713
      %v716 = vunpack.c.l.s4 1983009808
      %v717 = vunpack.c.0.s8 %v716
      %v718 = vlaneseq
      %v719 = vshrl.u32 %v718, 7
      %v720 = vsub.s32 %v717, %v719
      %v721 = vrot.slane %v707, %v720
      %v722 = vcombine.low %v697, %v701
      %v723 = vcombine.high %v697, %v701
      %v725 = vunpack.c.l.s4 1983009808
      %v726 = vunpack.c.0.s8 %v725
      %v727 = vlaneseq
      %v728 = vshrl.u32 %v727, 7
      %v729 = vsub.s32 %v726, %v728
      %v730 = vrot.slane %v722, %v729
      %v732 = vunpack.c.l.s4 1983009808
      %v733 = vunpack.c.0.s8 %v732
      %v734 = vlaneseq
      %v735 = vshrl.u32 %v734, 7
      %v736 = vsub.s32 %v733, %v735
      %v737 = vrot.slane %v723, %v736
      %v738 = vcombine.low %v714, %v730
      %v739 = vcombine.high %v714, %v730
      %v741 = vunpack.c.l.s4 1934713408
      %v742 = vunpack.c.0.s8 %v741
      %v743 = vlaneseq
      %v744 = vshrl.u32 %v743, 7
      %v745 = vsub.s32 %v742, %v744
      %v746 = vrot.slane %v738, %v745
      %v748 = vunpack.c.l.s4 1934713408
      %v749 = vunpack.c.0.s8 %v748
      %v750 = vlaneseq
      %v751 = vshrl.u32 %v750, 7
      %v752 = vsub.s32 %v749, %v751
      %v753 = vrot.slane %v739, %v752
      %v754 = vcombine.low %v721, %v737
      %v755 = vcombine.high %v721, %v737
      %v757 = vunpack.c.l.s4 1934713408
      %v758 = vunpack.c.0.s8 %v757
      %v759 = vlaneseq
      %v760 = vshrl.u32 %v759, 7
      %v761 = vsub.s32 %v758, %v760
      %v762 = vrot.slane %v754, %v761
      %v764 = vunpack.c.l.s4 1934713408
      %v765 = vunpack.c.0.s8 %v764
      %v766 = vlaneseq
      %v767 = vshrl.u32 %v766, 7
      %v768 = vsub.s32 %v765, %v767
      %v769 = vrot.slane %v755, %v768
      %v770 = vcombine.high %v746, 0.0
      %v771 = vcombine.high %v753, 0.0
      %v772 = vcombine.high %v762, 0.0
      %v773 = vcombine.high %v769, 0.0
      %v774 = vpack.c.bf16 %v586, %v586
      %v775 = vpack.c.bf16 %v610, %v610
      %v776 = vpack.c.bf16 %v593, %v593
      %v777 = vpack.c.bf16 %v611, %v611
      %v778 = vpack.c.bf16 %v602, %v602
      %v779 = vpack.c.bf16 %v612, %v612
      %v780 = vpack.c.bf16 %v609, %v609
      %v781 = vpack.c.bf16 %v613, %v613
      %v782 = vpack.c.bf16 %v666, %v666
      %v783 = vpack.c.bf16 %v690, %v690
      %v784 = vpack.c.bf16 %v673, %v673
      %v785 = vpack.c.bf16 %v691, %v691
      %v786 = vpack.c.bf16 %v682, %v682
      %v787 = vpack.c.bf16 %v692, %v692
      %v788 = vpack.c.bf16 %v689, %v689
      %v789 = vpack.c.bf16 %v693, %v693
      %v790 = vcombine.low %v774, %v778
      %v792 = vunpack.c.l.s4 1983009808
      %v793 = vunpack.c.0.s8 %v792
      %v794 = vlaneseq
      %v795 = vshrl.u32 %v794, 7
      %v796 = vsub.s32 %v793, %v795
      %v797 = vrot.slane %v790, %v796
      %v798 = vcombine.low %v776, %v780
      %v800 = vunpack.c.l.s4 1983009808
      %v801 = vunpack.c.0.s8 %v800
      %v802 = vlaneseq
      %v803 = vshrl.u32 %v802, 7
      %v804 = vsub.s32 %v801, %v803
      %v805 = vrot.slane %v798, %v804
      %v806 = vcombine.low %v797, %v805
      %v808 = vunpack.c.l.s4 1934713408
      %v809 = vunpack.c.0.s8 %v808
      %v810 = vlaneseq
      %v811 = vshrl.u32 %v810, 7
      %v812 = vsub.s32 %v809, %v811
      %v813 = vrot.slane %v806, %v812
      %v814 = vcombine.high %v813, 0
      %v815 = vcombine.low %v775, %v779
      %v817 = vunpack.c.l.s4 1983009808
      %v818 = vunpack.c.0.s8 %v817
      %v819 = vlaneseq
      %v820 = vshrl.u32 %v819, 7
      %v821 = vsub.s32 %v818, %v820
      %v822 = vrot.slane %v815, %v821
      %v823 = vcombine.low %v777, %v781
      %v825 = vunpack.c.l.s4 1983009808
      %v826 = vunpack.c.0.s8 %v825
      %v827 = vlaneseq
      %v828 = vshrl.u32 %v827, 7
      %v829 = vsub.s32 %v826, %v828
      %v830 = vrot.slane %v823, %v829
      %v831 = vcombine.low %v822, %v830
      %v833 = vunpack.c.l.s4 1934713408
      %v834 = vunpack.c.0.s8 %v833
      %v835 = vlaneseq
      %v836 = vshrl.u32 %v835, 7
      %v837 = vsub.s32 %v834, %v836
      %v838 = vrot.slane %v831, %v837
      %v839 = vcombine.high %v838, 0
      %v842 = vpack.i.b16 %v838, %v813
      %v843 = vshrl.u32 %v813, 16
      %v844 = vshrl.u32 %v838, 16
      %v845 = vpack.i.b16 %v844, %v843
      %v848 = vpack.i.b16 %v839, %v814
      %v849 = vshrl.u32 %v814, 16
      %v850 = vshrl.u32 %v839, 16
      %v851 = vpack.i.b16 %v850, %v849
      %852 = vxpose.xlu0.c.b16.start [1/8] %v782, 128
      %853 = vxpose.xlu0.c.b16.cont [2/8] 0, 128
      %854 = vxpose.xlu0.c.b16.cont [3/8] 0, 128
      %855 = vxpose.xlu0.c.b16.cont [4/8] 0, 128
      %856 = vxpose.xlu0.c.b16.cont [5/8] 0, 128
      %857 = vxpose.xlu0.c.b16.cont [6/8] 0, 128
      %858 = vxpose.xlu0.c.b16.cont [7/8] 0, 128
      %859 = vxpose.xlu0.c.b16.end [8/8] 0, 128
      %v860 = vpop.trf.xlu0
      %v861 = vpop.trf.xlu0
      %v862 = vpop.trf.xlu0
      %v863 = vpop.trf.xlu0
      %v864 = vpop.trf.xlu0
      %v865 = vpop.trf.xlu0
      %v866 = vpop.trf.xlu0
      %v867 = vpop.trf.xlu0
      %868 = vxpose.xlu0.c.b16.start [1/8] %v783, 128
      %869 = vxpose.xlu0.c.b16.cont [2/8] 0, 128
      %870 = vxpose.xlu0.c.b16.cont [3/8] 0, 128
      %871 = vxpose.xlu0.c.b16.cont [4/8] 0, 128
      %872 = vxpose.xlu0.c.b16.cont [5/8] 0, 128
      %873 = vxpose.xlu0.c.b16.cont [6/8] 0, 128
      %874 = vxpose.xlu0.c.b16.cont [7/8] 0, 128
      %875 = vxpose.xlu0.c.b16.end [8/8] 0, 128
      %v876 = vpop.trf.xlu0
      %v877 = vpop.trf.xlu0
      %v878 = vpop.trf.xlu0
      %v879 = vpop.trf.xlu0
      %v880 = vpop.trf.xlu0
      %v881 = vpop.trf.xlu0
      %v882 = vpop.trf.xlu0
      %v883 = vpop.trf.xlu0
      %884 = vxpose.xlu0.c.b16.start [1/8] %v784, 128
      %885 = vxpose.xlu0.c.b16.cont [2/8] 0, 128
      %886 = vxpose.xlu0.c.b16.cont [3/8] 0, 128
      %887 = vxpose.xlu0.c.b16.cont [4/8] 0, 128
      %888 = vxpose.xlu0.c.b16.cont [5/8] 0, 128
      %889 = vxpose.xlu0.c.b16.cont [6/8] 0, 128
      %890 = vxpose.xlu0.c.b16.cont [7/8] 0, 128
      %891 = vxpose.xlu0.c.b16.end [8/8] 0, 128
      %v892 = vpop.trf.xlu0
      %v893 = vpop.trf.xlu0
      %v894 = vpop.trf.xlu0
      %v895 = vpop.trf.xlu0
      %v896 = vpop.trf.xlu0
      %v897 = vpop.trf.xlu0
      %v898 = vpop.trf.xlu0
      %v899 = vpop.trf.xlu0
      %900 = vxpose.xlu0.c.b16.start [1/8] %v785, 128
      %901 = vxpose.xlu0.c.b16.cont [2/8] 0, 128
      %902 = vxpose.xlu0.c.b16.cont [3/8] 0, 128
      %903 = vxpose.xlu0.c.b16.cont [4/8] 0, 128
      %904 = vxpose.xlu0.c.b16.cont [5/8] 0, 128
      %905 = vxpose.xlu0.c.b16.cont [6/8] 0, 128
      %906 = vxpose.xlu0.c.b16.cont [7/8] 0, 128
      %907 = vxpose.xlu0.c.b16.end [8/8] 0, 128
      %v908 = vpop.trf.xlu0
      %v909 = vpop.trf.xlu0
      %v910 = vpop.trf.xlu0
      %v911 = vpop.trf.xlu0
      %v912 = vpop.trf.xlu0
      %v913 = vpop.trf.xlu0
      %v914 = vpop.trf.xlu0
      %v915 = vpop.trf.xlu0
      %916 = vxpose.xlu0.c.b16.start [1/8] %v786, 128
      %917 = vxpose.xlu0.c.b16.cont [2/8] 0, 128
      %918 = vxpose.xlu0.c.b16.cont [3/8] 0, 128
      %919 = vxpose.xlu0.c.b16.cont [4/8] 0, 128
      %920 = vxpose.xlu0.c.b16.cont [5/8] 0, 128
      %921 = vxpose.xlu0.c.b16.cont [6/8] 0, 128
      %922 = vxpose.xlu0.c.b16.cont [7/8] 0, 128
      %923 = vxpose.xlu0.c.b16.end [8/8] 0, 128
      %v924 = vpop.trf.xlu0
      %v925 = vpop.trf.xlu0
      %v926 = vpop.trf.xlu0
      %v927 = vpop.trf.xlu0
      %v928 = vpop.trf.xlu0
      %v929 = vpop.trf.xlu0
      %v930 = vpop.trf.xlu0
      %v931 = vpop.trf.xlu0
      %932 = vxpose.xlu0.c.b16.start [1/8] %v787, 128
      %933 = vxpose.xlu0.c.b16.cont [2/8] 0, 128
      %934 = vxpose.xlu0.c.b16.cont [3/8] 0, 128
      %935 = vxpose.xlu0.c.b16.cont [4/8] 0, 128
      %936 = vxpose.xlu0.c.b16.cont [5/8] 0, 128
      %937 = vxpose.xlu0.c.b16.cont [6/8] 0, 128
      %938 = vxpose.xlu0.c.b16.cont [7/8] 0, 128
      %939 = vxpose.xlu0.c.b16.end [8/8] 0, 128
      %v940 = vpop.trf.xlu0
      %v941 = vpop.trf.xlu0
      %v942 = vpop.trf.xlu0
      %v943 = vpop.trf.xlu0
      %v944 = vpop.trf.xlu0
      %v945 = vpop.trf.xlu0
      %v946 = vpop.trf.xlu0
      %v947 = vpop.trf.xlu0
      %948 = vxpose.xlu0.c.b16.start [1/8] %v788, 128
      %949 = vxpose.xlu0.c.b16.cont [2/8] 0, 128
      %950 = vxpose.xlu0.c.b16.cont [3/8] 0, 128
      %951 = vxpose.xlu0.c.b16.cont [4/8] 0, 128
      %952 = vxpose.xlu0.c.b16.cont [5/8] 0, 128
      %953 = vxpose.xlu0.c.b16.cont [6/8] 0, 128
      %954 = vxpose.xlu0.c.b16.cont [7/8] 0, 128
      %955 = vxpose.xlu0.c.b16.end [8/8] 0, 128
      %v956 = vpop.trf.xlu0
      %v957 = vpop.trf.xlu0
      %v958 = vpop.trf.xlu0
      %v959 = vpop.trf.xlu0
      %v960 = vpop.trf.xlu0
      %v961 = vpop.trf.xlu0
      %v962 = vpop.trf.xlu0
      %v963 = vpop.trf.xlu0
      %964 = vxpose.xlu0.c.b16.start [1/8] %v789, 128
      %965 = vxpose.xlu0.c.b16.cont [2/8] 0, 128
      %966 = vxpose.xlu0.c.b16.cont [3/8] 0, 128
      %967 = vxpose.xlu0.c.b16.cont [4/8] 0, 128
      %968 = vxpose.xlu0.c.b16.cont [5/8] 0, 128
      %969 = vxpose.xlu0.c.b16.cont [6/8] 0, 128
      %970 = vxpose.xlu0.c.b16.cont [7/8] 0, 128
      %971 = vxpose.xlu0.c.b16.end [8/8] 0, 128
      %v972 = vpop.trf.xlu0
      %v973 = vpop.trf.xlu0
      %v974 = vpop.trf.xlu0
      %v975 = vpop.trf.xlu0
      %v976 = vpop.trf.xlu0
      %v977 = vpop.trf.xlu0
      %v978 = vpop.trf.xlu0
      %v979 = vpop.trf.xlu0
      %v980 = vcombine.low %v860, %v924
      %v982 = vunpack.c.l.s4 1983009808
      %v983 = vunpack.c.0.s8 %v982
      %v984 = vlaneseq
      %v985 = vshrl.u32 %v984, 7
      %v986 = vsub.s32 %v983, %v985
      %v987 = vrot.slane %v980, %v986
      %v988 = vcombine.low %v892, %v956
      %v990 = vunpack.c.l.s4 1983009808
      %v991 = vunpack.c.0.s8 %v990
      %v992 = vlaneseq
      %v993 = vshrl.u32 %v992, 7
      %v994 = vsub.s32 %v991, %v993
      %v995 = vrot.slane %v988, %v994
      %v996 = vcombine.low %v987, %v995
      %v997 = vcombine.high %v987, %v995
      %v999 = vunpack.c.l.s4 1934713408
      %v1000 = vunpack.c.0.s8 %v999
      %v1001 = vlaneseq
      %v1002 = vshrl.u32 %v1001, 7
      %v1003 = vsub.s32 %v1000, %v1002
      %v1004 = vrot.slane %v996, %v1003
      %v1006 = vunpack.c.l.s4 1934713408
      %v1007 = vunpack.c.0.s8 %v1006
      %v1008 = vlaneseq
      %v1009 = vshrl.u32 %v1008, 7
      %v1010 = vsub.s32 %v1007, %v1009
      %v1011 = vrot.slane %v997, %v1010
      %v1012 = vcombine.high %v1004, 0
      %v1013 = vcombine.high %v1011, 0
      %v1014 = vcombine.low %v876, %v940
      %v1016 = vunpack.c.l.s4 1983009808
      %v1017 = vunpack.c.0.s8 %v1016
      %v1018 = vlaneseq
      %v1019 = vshrl.u32 %v1018, 7
      %v1020 = vsub.s32 %v1017, %v1019
      %v1021 = vrot.slane %v1014, %v1020
      %v1022 = vcombine.low %v908, %v972
      %v1024 = vunpack.c.l.s4 1983009808
      %v1025 = vunpack.c.0.s8 %v1024
      %v1026 = vlaneseq
      %v1027 = vshrl.u32 %v1026, 7
      %v1028 = vsub.s32 %v1025, %v1027
      %v1029 = vrot.slane %v1022, %v1028
      %v1030 = vcombine.low %v1021, %v1029
      %v1031 = vcombine.high %v1021, %v1029
      %v1033 = vunpack.c.l.s4 1934713408
      %v1034 = vunpack.c.0.s8 %v1033
      %v1035 = vlaneseq
      %v1036 = vshrl.u32 %v1035, 7
      %v1037 = vsub.s32 %v1034, %v1036
      %v1038 = vrot.slane %v1030, %v1037
      %v1040 = vunpack.c.l.s4 1934713408
      %v1041 = vunpack.c.0.s8 %v1040
      %v1042 = vlaneseq
      %v1043 = vshrl.u32 %v1042, 7
      %v1044 = vsub.s32 %v1041, %v1043
      %v1045 = vrot.slane %v1031, %v1044
      %v1046 = vcombine.high %v1038, 0
      %v1047 = vcombine.high %v1045, 0
      %v1050 = vpack.i.b16 %v1038, %v1004
      %v1052 = vshrl.u32 %v1004, 16
      %v1053 = vshrl.u32 %v1038, 16
      %v1054 = vpack.i.b16 %v1053, %v1052
      %v1058 = vpack.i.b16 %v1046, %v1012
      %v1060 = vshrl.u32 %v1012, 16
      %v1061 = vshrl.u32 %v1046, 16
      %v1062 = vpack.i.b16 %v1061, %v1060
      %v1066 = vpack.i.b16 %v1045, %v1011
      %v1068 = vshrl.u32 %v1011, 16
      %v1069 = vshrl.u32 %v1045, 16
      %v1070 = vpack.i.b16 %v1069, %v1068
      %v1074 = vpack.i.b16 %v1047, %v1013
      %v1076 = vshrl.u32 %v1013, 16
      %v1077 = vshrl.u32 %v1047, 16
      %v1078 = vpack.i.b16 %v1077, %v1076
      %1080 = vxpose.xlu0.c.b16.start [1/8] %v1050, 128
      %1081 = vxpose.xlu0.c.b16.cont [2/8] 0, 128
      %1082 = vxpose.xlu0.c.b16.cont [3/8] 0, 128
      %1083 = vxpose.xlu0.c.b16.cont [4/8] 0, 128
      %1084 = vxpose.xlu0.c.b16.cont [5/8] 0, 128
      %1085 = vxpose.xlu0.c.b16.cont [6/8] 0, 128
      %1086 = vxpose.xlu0.c.b16.cont [7/8] 0, 128
      %1087 = vxpose.xlu0.c.b16.end [8/8] 0, 128
      %v1088 = vpop.trf.xlu0
      %v1089 = vpop.trf.xlu0
      %v1090 = vpop.trf.xlu0
      %v1091 = vpop.trf.xlu0
      %v1092 = vpop.trf.xlu0
      %v1093 = vpop.trf.xlu0
      %v1094 = vpop.trf.xlu0
      %v1095 = vpop.trf.xlu0
      %1096 = vxpose.xlu0.c.b16.start [1/8] %v1054, 128
      %1097 = vxpose.xlu0.c.b16.cont [2/8] 0, 128
      %1098 = vxpose.xlu0.c.b16.cont [3/8] 0, 128
      %1099 = vxpose.xlu0.c.b16.cont [4/8] 0, 128
      %1100 = vxpose.xlu0.c.b16.cont [5/8] 0, 128
      %1101 = vxpose.xlu0.c.b16.cont [6/8] 0, 128
      %1102 = vxpose.xlu0.c.b16.cont [7/8] 0, 128
      %1103 = vxpose.xlu0.c.b16.end [8/8] 0, 128
      %v1104 = vpop.trf.xlu0
      %v1105 = vpop.trf.xlu0
      %v1106 = vpop.trf.xlu0
      %v1107 = vpop.trf.xlu0
      %v1108 = vpop.trf.xlu0
      %v1109 = vpop.trf.xlu0
      %v1110 = vpop.trf.xlu0
      %v1111 = vpop.trf.xlu0
      %1112 = vxpose.xlu0.c.b16.start [1/8] %v1058, 128
      %1113 = vxpose.xlu0.c.b16.cont [2/8] 0, 128
      %1114 = vxpose.xlu0.c.b16.cont [3/8] 0, 128
      %1115 = vxpose.xlu0.c.b16.cont [4/8] 0, 128
      %1116 = vxpose.xlu0.c.b16.cont [5/8] 0, 128
      %1117 = vxpose.xlu0.c.b16.cont [6/8] 0, 128
      %1118 = vxpose.xlu0.c.b16.cont [7/8] 0, 128
      %1119 = vxpose.xlu0.c.b16.end [8/8] 0, 128
      %v1120 = vpop.trf.xlu0
      %v1121 = vpop.trf.xlu0
      %v1122 = vpop.trf.xlu0
      %v1123 = vpop.trf.xlu0
      %v1124 = vpop.trf.xlu0
      %v1125 = vpop.trf.xlu0
      %v1126 = vpop.trf.xlu0
      %v1127 = vpop.trf.xlu0
      %1128 = vxpose.xlu0.c.b16.start [1/8] %v1062, 128
      %1129 = vxpose.xlu0.c.b16.cont [2/8] 0, 128
      %1130 = vxpose.xlu0.c.b16.cont [3/8] 0, 128
      %1131 = vxpose.xlu0.c.b16.cont [4/8] 0, 128
      %1132 = vxpose.xlu0.c.b16.cont [5/8] 0, 128
      %1133 = vxpose.xlu0.c.b16.cont [6/8] 0, 128
      %1134 = vxpose.xlu0.c.b16.cont [7/8] 0, 128
      %1135 = vxpose.xlu0.c.b16.end [8/8] 0, 128
      %v1136 = vpop.trf.xlu0
      %v1137 = vpop.trf.xlu0
      %v1138 = vpop.trf.xlu0
      %v1139 = vpop.trf.xlu0
      %v1140 = vpop.trf.xlu0
      %v1141 = vpop.trf.xlu0
      %v1142 = vpop.trf.xlu0
      %v1143 = vpop.trf.xlu0
      %1144 = vxpose.xlu0.c.b16.start [1/8] %v1066, 128
      %1145 = vxpose.xlu0.c.b16.cont [2/8] 0, 128
      %1146 = vxpose.xlu0.c.b16.cont [3/8] 0, 128
      %1147 = vxpose.xlu0.c.b16.cont [4/8] 0, 128
      %1148 = vxpose.xlu0.c.b16.cont [5/8] 0, 128
      %1149 = vxpose.xlu0.c.b16.cont [6/8] 0, 128
      %1150 = vxpose.xlu0.c.b16.cont [7/8] 0, 128
      %1151 = vxpose.xlu0.c.b16.end [8/8] 0, 128
      %v1152 = vpop.trf.xlu0
      %v1153 = vpop.trf.xlu0
      %v1154 = vpop.trf.xlu0
      %v1155 = vpop.trf.xlu0
      %v1156 = vpop.trf.xlu0
      %v1157 = vpop.trf.xlu0
      %v1158 = vpop.trf.xlu0
      %v1159 = vpop.trf.xlu0
      %1160 = vxpose.xlu0.c.b16.start [1/8] %v1070, 128
      %1161 = vxpose.xlu0.c.b16.cont [2/8] 0, 128
      %1162 = vxpose.xlu0.c.b16.cont [3/8] 0, 128
      %1163 = vxpose.xlu0.c.b16.cont [4/8] 0, 128
      %1164 = vxpose.xlu0.c.b16.cont [5/8] 0, 128
      %1165 = vxpose.xlu0.c.b16.cont [6/8] 0, 128
      %1166 = vxpose.xlu0.c.b16.cont [7/8] 0, 128
      %1167 = vxpose.xlu0.c.b16.end [8/8] 0, 128
      %v1168 = vpop.trf.xlu0
      %v1169 = vpop.trf.xlu0
      %v1170 = vpop.trf.xlu0
      %v1171 = vpop.trf.xlu0
      %v1172 = vpop.trf.xlu0
      %v1173 = vpop.trf.xlu0
      %v1174 = vpop.trf.xlu0
      %v1175 = vpop.trf.xlu0
      %1176 = vxpose.xlu0.c.b16.start [1/8] %v1074, 128
      %1177 = vxpose.xlu0.c.b16.cont [2/8] 0, 128
      %1178 = vxpose.xlu0.c.b16.cont [3/8] 0, 128
      %1179 = vxpose.xlu0.c.b16.cont [4/8] 0, 128
      %1180 = vxpose.xlu0.c.b16.cont [5/8] 0, 128
      %1181 = vxpose.xlu0.c.b16.cont [6/8] 0, 128
      %1182 = vxpose.xlu0.c.b16.cont [7/8] 0, 128
      %1183 = vxpose.xlu0.c.b16.end [8/8] 0, 128
      %v1184 = vpop.trf.xlu0
      %v1185 = vpop.trf.xlu0
      %v1186 = vpop.trf.xlu0
      %v1187 = vpop.trf.xlu0
      %v1188 = vpop.trf.xlu0
      %v1189 = vpop.trf.xlu0
      %v1190 = vpop.trf.xlu0
      %v1191 = vpop.trf.xlu0
      %1192 = vxpose.xlu0.c.b16.start [1/8] %v1078, 128
      %1193 = vxpose.xlu0.c.b16.cont [2/8] 0, 128
      %1194 = vxpose.xlu0.c.b16.cont [3/8] 0, 128
      %1195 = vxpose.xlu0.c.b16.cont [4/8] 0, 128
      %1196 = vxpose.xlu0.c.b16.cont [5/8] 0, 128
      %1197 = vxpose.xlu0.c.b16.cont [6/8] 0, 128
      %1198 = vxpose.xlu0.c.b16.cont [7/8] 0, 128
      %1199 = vxpose.xlu0.c.b16.end [8/8] 0, 128
      %v1200 = vpop.trf.xlu0
      %v1201 = vpop.trf.xlu0
      %v1202 = vpop.trf.xlu0
      %v1203 = vpop.trf.xlu0
      %v1204 = vpop.trf.xlu0
      %v1205 = vpop.trf.xlu0
      %v1206 = vpop.trf.xlu0
      %v1207 = vpop.trf.xlu0
      %v1208 = vcombine.low %v1088, %v1152
      %v1210 = vunpack.c.l.s4 1983009808
      %v1211 = vunpack.c.0.s8 %v1210
      %v1212 = vlaneseq
      %v1213 = vshrl.u32 %v1212, 7
      %v1214 = vsub.s32 %v1211, %v1213
      %v1215 = vrot.slane %v1208, %v1214
      %v1216 = vcombine.low %v1120, %v1184
      %v1218 = vunpack.c.l.s4 1983009808
      %v1219 = vunpack.c.0.s8 %v1218
      %v1220 = vlaneseq
      %v1221 = vshrl.u32 %v1220, 7
      %v1222 = vsub.s32 %v1219, %v1221
      %v1223 = vrot.slane %v1216, %v1222
      %v1224 = vcombine.low %v1215, %v1223
      %v1226 = vunpack.c.l.s4 1934713408
      %v1227 = vunpack.c.0.s8 %v1226
      %v1228 = vlaneseq
      %v1229 = vshrl.u32 %v1228, 7
      %v1230 = vsub.s32 %v1227, %v1229
      %v1231 = vrot.slane %v1224, %v1230
      %v1232 = vcombine.high %v1231, 0
      %v1233 = vcombine.low %v1104, %v1168
      %v1235 = vunpack.c.l.s4 1983009808
      %v1236 = vunpack.c.0.s8 %v1235
      %v1237 = vlaneseq
      %v1238 = vshrl.u32 %v1237, 7
      %v1239 = vsub.s32 %v1236, %v1238
      %v1240 = vrot.slane %v1233, %v1239
      %v1241 = vcombine.low %v1136, %v1200
      %v1243 = vunpack.c.l.s4 1983009808
      %v1244 = vunpack.c.0.s8 %v1243
      %v1245 = vlaneseq
      %v1246 = vshrl.u32 %v1245, 7
      %v1247 = vsub.s32 %v1244, %v1246
      %v1248 = vrot.slane %v1241, %v1247
      %v1249 = vcombine.low %v1240, %v1248
      %v1251 = vunpack.c.l.s4 1934713408
      %v1252 = vunpack.c.0.s8 %v1251
      %v1253 = vlaneseq
      %v1254 = vshrl.u32 %v1253, 7
      %v1255 = vsub.s32 %v1252, %v1254
      %v1256 = vrot.slane %v1249, %v1255
      %v1257 = vcombine.high %v1256, 0
      %v1260 = vpack.i.b16 %v1256, %v1231
      %v1261 = vshrl.u32 %v1231, 16
      %v1262 = vshrl.u32 %v1256, 16
      %v1263 = vpack.i.b16 %v1262, %v1261
      %v1266 = vpack.i.b16 %v1257, %v1232
      %v1267 = vshrl.u32 %v1232, 16
      %v1268 = vshrl.u32 %v1257, 16
      %v1269 = vpack.i.b16 %v1268, %v1267
      %vm1270 = vcmask 64512
      %v1272 = vsel %vm1270, %v842, 0
      %vm1274 = vcmask 1043456
      %v1276 = vsel %vm1274, %v1260, 0
      %1278 = vmatprep.subr.bf16.mxu0 0
      %1279 = vmatpush1.bf16.msra.mxu0 %v1276
      %1280 = vmatprep.subr.bf16.mxu0 0
      %1281 = vmatpush1.bf16.msra.mxu0 0
      %1282 = vmatprep.subr.bf16.mxu0 0
      %1283 = vmatpush1.bf16.msra.mxu0 0
      %1284 = vmatprep.subr.bf16.mxu0 0
      %1285 = vmatpush1.bf16.msra.mxu0 0
      %1286 = vmatprep.subr.bf16.mxu0 0
      %1287 = vmatpush1.bf16.msra.mxu0 0
      %1288 = vmatprep.subr.bf16.mxu0 0
      %1289 = vmatpush1.bf16.msra.mxu0 0
      %1290 = vmatprep.subr.bf16.mxu0 0
      %1291 = vmatpush1.bf16.msra.mxu0 0
      %1292 = vmatprep.subr.bf16.mxu0 0
      %1293 = vmatpush1.bf16.msra.mxu0 0
      %1294 = vmatprep.subr.bf16.mxu0 0
      %1295 = vmatpush1.bf16.msra.mxu0 0
      %1296 = vmatprep.subr.bf16.mxu0 0
      %1297 = vmatpush1.bf16.msra.mxu0 0
      %1298 = vmatprep.subr.bf16.mxu0 0
      %1299 = vmatpush1.bf16.msra.mxu0 0
      %1300 = vmatprep.subr.bf16.mxu0 0
      %1301 = vmatpush1.bf16.msra.mxu0 0
      %1302 = vmatprep.subr.bf16.mxu0 0
      %1303 = vmatpush1.bf16.msra.mxu0 0
      %1304 = vmatprep.subr.bf16.mxu0 0
      %1305 = vmatpush1.bf16.msra.mxu0 0
      %1306 = vmatprep.subr.bf16.mxu0 0
      %1307 = vmatpush1.bf16.msra.mxu0 0
      %1308 = vmatprep.subr.bf16.mxu0 0
      %1309 = vmatpush1.bf16.msra.mxu0 0
      %1310 = vmatprep.mubr.bf16.mxu0 0
      %1311 = vmatmul.mubr.bf16.gmra.mrb[0].mxu0 %v1272
      %v1312 = vpop.f32.mrb[0].mxu0
      %v1313 = vadd.f32 0.0, %v1312
      %v1314 = vpop.f32.mrb[0].mxu0
      %v1315 = vpop.f32.mrb[0].mxu0
      %v1316 = vpop.f32.mrb[0].mxu0
      %1317 = vdwg.mxu0
      %v1319 = vsel %vm1270, %v845, 0
      %v1322 = vsel %vm1274, %v1263, 0
      %1324 = vmatprep.subr.bf16.mxu0 0
      %1325 = vmatpush1.bf16.msra.mxu0 %v1322
      %1326 = vmatprep.subr.bf16.mxu0 0
      %1327 = vmatpush1.bf16.msra.mxu0 0
      %1328 = vmatprep.subr.bf16.mxu0 0
      %1329 = vmatpush1.bf16.msra.mxu0 0
      %1330 = vmatprep.subr.bf16.mxu0 0
      %1331 = vmatpush1.bf16.msra.mxu0 0
      %1332 = vmatprep.subr.bf16.mxu0 0
      %1333 = vmatpush1.bf16.msra.mxu0 0
      %1334 = vmatprep.subr.bf16.mxu0 0
      %1335 = vmatpush1.bf16.msra.mxu0 0
      %1336 = vmatprep.subr.bf16.mxu0 0
      %1337 = vmatpush1.bf16.msra.mxu0 0
      %1338 = vmatprep.subr.bf16.mxu0 0
      %1339 = vmatpush1.bf16.msra.mxu0 0
      %1340 = vmatprep.subr.bf16.mxu0 0
      %1341 = vmatpush1.bf16.msra.mxu0 0
      %1342 = vmatprep.subr.bf16.mxu0 0
      %1343 = vmatpush1.bf16.msra.mxu0 0
      %1344 = vmatprep.subr.bf16.mxu0 0
      %1345 = vmatpush1.bf16.msra.mxu0 0
      %1346 = vmatprep.subr.bf16.mxu0 0
      %1347 = vmatpush1.bf16.msra.mxu0 0
      %1348 = vmatprep.subr.bf16.mxu0 0
      %1349 = vmatpush1.bf16.msra.mxu0 0
      %1350 = vmatprep.subr.bf16.mxu0 0
      %1351 = vmatpush1.bf16.msra.mxu0 0
      %1352 = vmatprep.subr.bf16.mxu0 0
      %1353 = vmatpush1.bf16.msra.mxu0 0
      %1354 = vmatprep.subr.bf16.mxu0 0
      %1355 = vmatpush1.bf16.msra.mxu0 0
      %1356 = vmatprep.mubr.bf16.mxu0 0
      %1357 = vmatmul.mubr.bf16.gmra.mrb[0].mxu0 %v1319
      %v1358 = vpop.f32.mrb[0].mxu0
      %v1359 = vadd.f32 0.0, %v1358
      %v1360 = vpop.f32.mrb[0].mxu0
      %v1361 = vpop.f32.mrb[0].mxu0
      %v1362 = vpop.f32.mrb[0].mxu0
      %1363 = vdwg.mxu0
      %v1365 = vsel %vm1270, %v848, 0
      %v1368 = vsel %vm1274, %v1266, 0
      %1370 = vmatprep.subr.bf16.mxu0 0
      %1371 = vmatpush1.bf16.msra.mxu0 %v1368
      %1372 = vmatprep.subr.bf16.mxu0 0
      %1373 = vmatpush1.bf16.msra.mxu0 0
      %1374 = vmatprep.subr.bf16.mxu0 0
      %1375 = vmatpush1.bf16.msra.mxu0 0
      %1376 = vmatprep.subr.bf16.mxu0 0
      %1377 = vmatpush1.bf16.msra.mxu0 0
      %1378 = vmatprep.subr.bf16.mxu0 0
      %1379 = vmatpush1.bf16.msra.mxu0 0
      %1380 = vmatprep.subr.bf16.mxu0 0
      %1381 = vmatpush1.bf16.msra.mxu0 0
      %1382 = vmatprep.subr.bf16.mxu0 0
      %1383 = vmatpush1.bf16.msra.mxu0 0
      %1384 = vmatprep.subr.bf16.mxu0 0
      %1385 = vmatpush1.bf16.msra.mxu0 0
      %1386 = vmatprep.subr.bf16.mxu0 0
      %1387 = vmatpush1.bf16.msra.mxu0 0
      %1388 = vmatprep.subr.bf16.mxu0 0
      %1389 = vmatpush1.bf16.msra.mxu0 0
      %1390 = vmatprep.subr.bf16.mxu0 0
      %1391 = vmatpush1.bf16.msra.mxu0 0
      %1392 = vmatprep.subr.bf16.mxu0 0
      %1393 = vmatpush1.bf16.msra.mxu0 0
      %1394 = vmatprep.subr.bf16.mxu0 0
      %1395 = vmatpush1.bf16.msra.mxu0 0
      %1396 = vmatprep.subr.bf16.mxu0 0
      %1397 = vmatpush1.bf16.msra.mxu0 0
      %1398 = vmatprep.subr.bf16.mxu0 0
      %1399 = vmatpush1.bf16.msra.mxu0 0
      %1400 = vmatprep.subr.bf16.mxu0 0
      %1401 = vmatpush1.bf16.msra.mxu0 0
      %1402 = vmatprep.mubr.bf16.mxu0 0
      %1403 = vmatmul.mubr.bf16.gmra.mrb[0].mxu0 %v1365
      %v1404 = vpop.f32.mrb[0].mxu0
      %v1405 = vadd.f32 0.0, %v1404
      %v1406 = vpop.f32.mrb[0].mxu0
      %v1407 = vpop.f32.mrb[0].mxu0
      %v1408 = vpop.f32.mrb[0].mxu0
      %1409 = vdwg.mxu0
      %v1411 = vsel %vm1270, %v851, 0
      %v1414 = vsel %vm1274, %v1269, 0
      %1416 = vmatprep.subr.bf16.mxu0 0
      %1417 = vmatpush1.bf16.msra.mxu0 %v1414
      %1418 = vmatprep.subr.bf16.mxu0 0
      %1419 = vmatpush1.bf16.msra.mxu0 0
      %1420 = vmatprep.subr.bf16.mxu0 0
      %1421 = vmatpush1.bf16.msra.mxu0 0
      %1422 = vmatprep.subr.bf16.mxu0 0
      %1423 = vmatpush1.bf16.msra.mxu0 0
      %1424 = vmatprep.subr.bf16.mxu0 0
      %1425 = vmatpush1.bf16.msra.mxu0 0
      %1426 = vmatprep.subr.bf16.mxu0 0
      %1427 = vmatpush1.bf16.msra.mxu0 0
      %1428 = vmatprep.subr.bf16.mxu0 0
      %1429 = vmatpush1.bf16.msra.mxu0 0
      %1430 = vmatprep.subr.bf16.mxu0 0
      %1431 = vmatpush1.bf16.msra.mxu0 0
      %1432 = vmatprep.subr.bf16.mxu0 0
      %1433 = vmatpush1.bf16.msra.mxu0 0
      %1434 = vmatprep.subr.bf16.mxu0 0
      %1435 = vmatpush1.bf16.msra.mxu0 0
      %1436 = vmatprep.subr.bf16.mxu0 0
      %1437 = vmatpush1.bf16.msra.mxu0 0
      %1438 = vmatprep.subr.bf16.mxu0 0
      %1439 = vmatpush1.bf16.msra.mxu0 0
      %1440 = vmatprep.subr.bf16.mxu0 0
      %1441 = vmatpush1.bf16.msra.mxu0 0
      %1442 = vmatprep.subr.bf16.mxu0 0
      %1443 = vmatpush1.bf16.msra.mxu0 0
      %1444 = vmatprep.subr.bf16.mxu0 0
      %1445 = vmatpush1.bf16.msra.mxu0 0
      %1446 = vmatprep.subr.bf16.mxu0 0
      %1447 = vmatpush1.bf16.msra.mxu0 0
      %1448 = vmatprep.mubr.bf16.mxu0 0
      %1449 = vmatmul.mubr.bf16.gmra.mrb[0].mxu0 %v1411
      %v1450 = vpop.f32.mrb[0].mxu0
      %v1451 = vadd.f32 0.0, %v1450
      %v1452 = vpop.f32.mrb[0].mxu0
      %v1453 = vpop.f32.mrb[0].mxu0
      %v1454 = vpop.f32.mrb[0].mxu0
      %1455 = vdwg.mxu0
      %v1456 = vsel %vm1270, %v1313, -inf
      %1457 = vmax.xlane.f32.xlu0 %v1456
      %v1458 = vpop.xlane.xlu0 %1457
      %v1459 = vsel %vm1270, %v1359, -inf
      %1460 = vmax.xlane.f32.xlu0 %v1459
      %v1461 = vpop.xlane.xlu0 %1460
      %v1462 = vsel %vm1270, %v1405, -inf
      %1463 = vmax.xlane.f32.xlu0 %v1462
      %v1464 = vpop.xlane.xlu0 %1463
      %v1465 = vsel %vm1270, %v1451, -inf
      %1466 = vmax.xlane.f32.xlu0 %v1465
      %v1467 = vpop.xlane.xlu0 %1466
      %v1468 = vsub.f32 %v1313, %v1458
      %v1469 = vsub.f32 %v1359, %v1461
      %v1470 = vsub.f32 %v1405, %v1464
      %v1471 = vsub.f32 %v1451, %v1467
      %v1472 = vmul.f32 %v1468, 1.442695
      %v1473 = vpow.pop %v1472
      %v1474 = vmul.f32 %v1469, 1.442695
      %v1475 = vpow.pop %v1474
      %v1476 = vmul.f32 %v1470, 1.442695
      %v1477 = vpow.pop %v1476
      %v1478 = vmul.f32 %v1471, 1.442695
      %v1479 = vpow.pop %v1478
      %v1480 = vsel %vm1270, %v1473, 0.0
      %1481 = vadd.xlane.f32.xlu0 %v1480
      %v1482 = vpop.xlane.xlu0 %1481
      %v1483 = vsel %vm1270, %v1475, 0.0
      %1484 = vadd.xlane.f32.xlu0 %v1483
      %v1485 = vpop.xlane.xlu0 %1484
      %v1486 = vsel %vm1270, %v1477, 0.0
      %1487 = vadd.xlane.f32.xlu0 %v1486
      %v1488 = vpop.xlane.xlu0 %1487
      %v1489 = vsel %vm1270, %v1479, 0.0
      %1490 = vadd.xlane.f32.xlu0 %v1489
      %v1491 = vpop.xlane.xlu0 %1490
      %v1492 = vrcp.pop %v1482
      %v1493 = vrcp.pop %v1485
      %v1494 = vrcp.pop %v1488
      %v1495 = vrcp.pop %v1491
      %v1496 = vmul.f32 %v1473, %v1492
      %v1497 = vmul.f32 %v1475, %v1493
      %v1498 = vmul.f32 %v1477, %v1494
      %v1499 = vmul.f32 %v1479, %v1495
      %v1500 = vpack.c.bf16 %v1496, %v1496
      %v1501 = vpack.c.bf16 %v1497, %v1497
      %v1502 = vpack.c.bf16 %v1498, %v1498
      %v1503 = vpack.c.bf16 %v1499, %v1499
      %v1504 = vpack.c.bf16 %v746, %v746
      %v1505 = vpack.c.bf16 %v770, %v770
      %v1506 = vpack.c.bf16 %v753, %v753
      %v1507 = vpack.c.bf16 %v771, %v771
      %v1508 = vpack.c.bf16 %v762, %v762
      %v1509 = vpack.c.bf16 %v772, %v772
      %v1510 = vpack.c.bf16 %v769, %v769
      %v1511 = vpack.c.bf16 %v773, %v773
      %v1512 = vcombine.low %v1504, %v1508
      %v1514 = vunpack.c.l.s4 1983009808
      %v1515 = vunpack.c.0.s8 %v1514
      %v1516 = vlaneseq
      %v1517 = vshrl.u32 %v1516, 7
      %v1518 = vsub.s32 %v1515, %v1517
      %v1519 = vrot.slane %v1512, %v1518
      %v1520 = vcombine.low %v1506, %v1510
      %v1522 = vunpack.c.l.s4 1983009808
      %v1523 = vunpack.c.0.s8 %v1522
      %v1524 = vlaneseq
      %v1525 = vshrl.u32 %v1524, 7
      %v1526 = vsub.s32 %v1523, %v1525
      %v1527 = vrot.slane %v1520, %v1526
      %v1528 = vcombine.low %v1519, %v1527
      %v1530 = vunpack.c.l.s4 1934713408
      %v1531 = vunpack.c.0.s8 %v1530
      %v1532 = vlaneseq
      %v1533 = vshrl.u32 %v1532, 7
      %v1534 = vsub.s32 %v1531, %v1533
      %v1535 = vrot.slane %v1528, %v1534
      %v1536 = vcombine.high %v1535, 0
      %v1537 = vcombine.low %v1505, %v1509
      %v1539 = vunpack.c.l.s4 1983009808
      %v1540 = vunpack.c.0.s8 %v1539
      %v1541 = vlaneseq
      %v1542 = vshrl.u32 %v1541, 7
      %v1543 = vsub.s32 %v1540, %v1542
      %v1544 = vrot.slane %v1537, %v1543
      %v1545 = vcombine.low %v1507, %v1511
      %v1547 = vunpack.c.l.s4 1983009808
      %v1548 = vunpack.c.0.s8 %v1547
      %v1549 = vlaneseq
      %v1550 = vshrl.u32 %v1549, 7
      %v1551 = vsub.s32 %v1548, %v1550
      %v1552 = vrot.slane %v1545, %v1551
      %v1553 = vcombine.low %v1544, %v1552
      %v1555 = vunpack.c.l.s4 1934713408
      %v1556 = vunpack.c.0.s8 %v1555
      %v1557 = vlaneseq
      %v1558 = vshrl.u32 %v1557, 7
      %v1559 = vsub.s32 %v1556, %v1558
      %v1560 = vrot.slane %v1553, %v1559
      %v1561 = vcombine.high %v1560, 0
      %v1564 = vpack.i.b16 %v1560, %v1535
      %v1565 = vshrl.u32 %v1535, 16
      %v1566 = vshrl.u32 %v1560, 16
      %v1567 = vpack.i.b16 %v1566, %v1565
      %v1570 = vpack.i.b16 %v1561, %v1536
      %v1571 = vshrl.u32 %v1536, 16
      %v1572 = vshrl.u32 %v1561, 16
      %v1573 = vpack.i.b16 %v1572, %v1571
      %v1575 = vsel %vm1270, %v1500, 0
      %v1578 = vsel %vm1274, %v1564, 0
      %1580 = vmatprep.subr.bf16.mxu0 0
      %1581 = vmatpush1.bf16.msra.mxu0 %v1578
      %1582 = vmatprep.subr.bf16.mxu0 0
      %1583 = vmatpush1.bf16.msra.mxu0 0
      %1584 = vmatprep.subr.bf16.mxu0 0
      %1585 = vmatpush1.bf16.msra.mxu0 0
      %1586 = vmatprep.subr.bf16.mxu0 0
      %1587 = vmatpush1.bf16.msra.mxu0 0
      %1588 = vmatprep.subr.bf16.mxu0 0
      %1589 = vmatpush1.bf16.msra.mxu0 0
      %1590 = vmatprep.subr.bf16.mxu0 0
      %1591 = vmatpush1.bf16.msra.mxu0 0
      %1592 = vmatprep.subr.bf16.mxu0 0
      %1593 = vmatpush1.bf16.msra.mxu0 0
      %1594 = vmatprep.subr.bf16.mxu0 0
      %1595 = vmatpush1.bf16.msra.mxu0 0
      %1596 = vmatprep.subr.bf16.mxu0 0
      %1597 = vmatpush1.bf16.msra.mxu0 0
      %1598 = vmatprep.subr.bf16.mxu0 0
      %1599 = vmatpush1.bf16.msra.mxu0 0
      %1600 = vmatprep.subr.bf16.mxu0 0
      %1601 = vmatpush1.bf16.msra.mxu0 0
      %1602 = vmatprep.subr.bf16.mxu0 0
      %1603 = vmatpush1.bf16.msra.mxu0 0
      %1604 = vmatprep.subr.bf16.mxu0 0
      %1605 = vmatpush1.bf16.msra.mxu0 0
      %1606 = vmatprep.subr.bf16.mxu0 0
      %1607 = vmatpush1.bf16.msra.mxu0 0
      %1608 = vmatprep.subr.bf16.mxu0 0
      %1609 = vmatpush1.bf16.msra.mxu0 0
      %1610 = vmatprep.subr.bf16.mxu0 0
      %1611 = vmatpush1.bf16.msra.mxu0 0
      %1612 = vmatprep.mubr.bf16.mxu0 0
      %1613 = vmatmul.mubr.bf16.gmra.mrb[0].mxu0 %v1575
      %v1614 = vpop.f32.mrb[0].mxu0
      %v1615 = vadd.f32 0.0, %v1614
      %v1616 = vpop.f32.mrb[0].mxu0
      %v1617 = vpop.f32.mrb[0].mxu0
      %v1618 = vpop.f32.mrb[0].mxu0
      %1619 = vdwg.mxu0
      %v1621 = vsel %vm1270, %v1501, 0
      %v1624 = vsel %vm1274, %v1567, 0
      %1626 = vmatprep.subr.bf16.mxu0 0
      %1627 = vmatpush1.bf16.msra.mxu0 %v1624
      %1628 = vmatprep.subr.bf16.mxu0 0
      %1629 = vmatpush1.bf16.msra.mxu0 0
      %1630 = vmatprep.subr.bf16.mxu0 0
      %1631 = vmatpush1.bf16.msra.mxu0 0
      %1632 = vmatprep.subr.bf16.mxu0 0
      %1633 = vmatpush1.bf16.msra.mxu0 0
      %1634 = vmatprep.subr.bf16.mxu0 0
      %1635 = vmatpush1.bf16.msra.mxu0 0
      %1636 = vmatprep.subr.bf16.mxu0 0
      %1637 = vmatpush1.bf16.msra.mxu0 0
      %1638 = vmatprep.subr.bf16.mxu0 0
      %1639 = vmatpush1.bf16.msra.mxu0 0
      %1640 = vmatprep.subr.bf16.mxu0 0
      %1641 = vmatpush1.bf16.msra.mxu0 0
      %1642 = vmatprep.subr.bf16.mxu0 0
      %1643 = vmatpush1.bf16.msra.mxu0 0
      %1644 = vmatprep.subr.bf16.mxu0 0
      %1645 = vmatpush1.bf16.msra.mxu0 0
      %1646 = vmatprep.subr.bf16.mxu0 0
      %1647 = vmatpush1.bf16.msra.mxu0 0
      %1648 = vmatprep.subr.bf16.mxu0 0
      %1649 = vmatpush1.bf16.msra.mxu0 0
      %1650 = vmatprep.subr.bf16.mxu0 0
      %1651 = vmatpush1.bf16.msra.mxu0 0
      %1652 = vmatprep.subr.bf16.mxu0 0
      %1653 = vmatpush1.bf16.msra.mxu0 0
      %1654 = vmatprep.subr.bf16.mxu0 0
      %1655 = vmatpush1.bf16.msra.mxu0 0
      %1656 = vmatprep.subr.bf16.mxu0 0
      %1657 = vmatpush1.bf16.msra.mxu0 0
      %1658 = vmatprep.mubr.bf16.mxu0 0
      %1659 = vmatmul.mubr.bf16.gmra.mrb[0].mxu0 %v1621
      %v1660 = vpop.f32.mrb[0].mxu0
      %v1661 = vadd.f32 0.0, %v1660
      %v1662 = vpop.f32.mrb[0].mxu0
      %v1663 = vpop.f32.mrb[0].mxu0
      %v1664 = vpop.f32.mrb[0].mxu0
      %1665 = vdwg.mxu0
      %v1667 = vsel %vm1270, %v1502, 0
      %v1670 = vsel %vm1274, %v1570, 0
      %1672 = vmatprep.subr.bf16.mxu0 0
      %1673 = vmatpush1.bf16.msra.mxu0 %v1670
      %1674 = vmatprep.subr.bf16.mxu0 0
      %1675 = vmatpush1.bf16.msra.mxu0 0
      %1676 = vmatprep.subr.bf16.mxu0 0
      %1677 = vmatpush1.bf16.msra.mxu0 0
      %1678 = vmatprep.subr.bf16.mxu0 0
      %1679 = vmatpush1.bf16.msra.mxu0 0
      %1680 = vmatprep.subr.bf16.mxu0 0
      %1681 = vmatpush1.bf16.msra.mxu0 0
      %1682 = vmatprep.subr.bf16.mxu0 0
      %1683 = vmatpush1.bf16.msra.mxu0 0
      %1684 = vmatprep.subr.bf16.mxu0 0
      %1685 = vmatpush1.bf16.msra.mxu0 0
      %1686 = vmatprep.subr.bf16.mxu0 0
      %1687 = vmatpush1.bf16.msra.mxu0 0
      %1688 = vmatprep.subr.bf16.mxu0 0
      %1689 = vmatpush1.bf16.msra.mxu0 0
      %1690 = vmatprep.subr.bf16.mxu0 0
      %1691 = vmatpush1.bf16.msra.mxu0 0
      %1692 = vmatprep.subr.bf16.mxu0 0
      %1693 = vmatpush1.bf16.msra.mxu0 0
      %1694 = vmatprep.subr.bf16.mxu0 0
      %1695 = vmatpush1.bf16.msra.mxu0 0
      %1696 = vmatprep.subr.bf16.mxu0 0
      %1697 = vmatpush1.bf16.msra.mxu0 0
      %1698 = vmatprep.subr.bf16.mxu0 0
      %1699 = vmatpush1.bf16.msra.mxu0 0
      %1700 = vmatprep.subr.bf16.mxu0 0
      %1701 = vmatpush1.bf16.msra.mxu0 0
      %1702 = vmatprep.subr.bf16.mxu0 0
      %1703 = vmatpush1.bf16.msra.mxu0 0
      %1704 = vmatprep.mubr.bf16.mxu0 0
      %1705 = vmatmul.mubr.bf16.gmra.mrb[0].mxu0 %v1667
      %v1706 = vpop.f32.mrb[0].mxu0
      %v1707 = vadd.f32 0.0, %v1706
      %v1708 = vpop.f32.mrb[0].mxu0
      %v1709 = vpop.f32.mrb[0].mxu0
      %v1710 = vpop.f32.mrb[0].mxu0
      %1711 = vdwg.mxu0
      %v1713 = vsel %vm1270, %v1503, 0
      %v1716 = vsel %vm1274, %v1573, 0
      %1718 = vmatprep.subr.bf16.mxu0 0
      %1719 = vmatpush1.bf16.msra.mxu0 %v1716
      %1720 = vmatprep.subr.bf16.mxu0 0
      %1721 = vmatpush1.bf16.msra.mxu0 0
      %1722 = vmatprep.subr.bf16.mxu0 0
      %1723 = vmatpush1.bf16.msra.mxu0 0
      %1724 = vmatprep.subr.bf16.mxu0 0
      %1725 = vmatpush1.bf16.msra.mxu0 0
      %1726 = vmatprep.subr.bf16.mxu0 0
      %1727 = vmatpush1.bf16.msra.mxu0 0
      %1728 = vmatprep.subr.bf16.mxu0 0
      %1729 = vmatpush1.bf16.msra.mxu0 0
      %1730 = vmatprep.subr.bf16.mxu0 0
      %1731 = vmatpush1.bf16.msra.mxu0 0
      %1732 = vmatprep.subr.bf16.mxu0 0
      %1733 = vmatpush1.bf16.msra.mxu0 0
      %1734 = vmatprep.subr.bf16.mxu0 0
      %1735 = vmatpush1.bf16.msra.mxu0 0
      %1736 = vmatprep.subr.bf16.mxu0 0
      %1737 = vmatpush1.bf16.msra.mxu0 0
      %1738 = vmatprep.subr.bf16.mxu0 0
      %1739 = vmatpush1.bf16.msra.mxu0 0
      %1740 = vmatprep.subr.bf16.mxu0 0
      %1741 = vmatpush1.bf16.msra.mxu0 0
      %1742 = vmatprep.subr.bf16.mxu0 0
      %1743 = vmatpush1.bf16.msra.mxu0 0
      %1744 = vmatprep.subr.bf16.mxu0 0
      %1745 = vmatpush1.bf16.msra.mxu0 0
      %1746 = vmatprep.subr.bf16.mxu0 0
      %1747 = vmatpush1.bf16.msra.mxu0 0
      %1748 = vmatprep.subr.bf16.mxu0 0
      %1749 = vmatpush1.bf16.msra.mxu0 0
      %1750 = vmatprep.mubr.bf16.mxu0 0
      %1751 = vmatmul.mubr.bf16.gmra.mrb[0].mxu0 %v1713
      %v1752 = vpop.f32.mrb[0].mxu0
      %v1753 = vadd.f32 0.0, %v1752
      %v1754 = vpop.f32.mrb[0].mxu0
      %v1755 = vpop.f32.mrb[0].mxu0
      %v1756 = vpop.f32.mrb[0].mxu0
      %1757 = vdwg.mxu0
      %v1758 = vcombine.low %v1615, %v1707
      %v1759 = vcombine.high %v1615, %v1707
      %v1761 = vunpack.c.l.s4 1983009808
      %v1762 = vunpack.c.0.s8 %v1761
      %v1763 = vlaneseq
      %v1764 = vshrl.u32 %v1763, 7
      %v1765 = vsub.s32 %v1762, %v1764
      %v1766 = vrot.slane %v1758, %v1765
      %v1768 = vunpack.c.l.s4 1983009808
      %v1769 = vunpack.c.0.s8 %v1768
      %v1770 = vlaneseq
      %v1771 = vshrl.u32 %v1770, 7
      %v1772 = vsub.s32 %v1769, %v1771
      %v1773 = vrot.slane %v1759, %v1772
      %v1774 = vcombine.low %v1661, %v1753
      %v1775 = vcombine.high %v1661, %v1753
      %v1777 = vunpack.c.l.s4 1983009808
      %v1778 = vunpack.c.0.s8 %v1777
      %v1779 = vlaneseq
      %v1780 = vshrl.u32 %v1779, 7
      %v1781 = vsub.s32 %v1778, %v1780
      %v1782 = vrot.slane %v1774, %v1781
      %v1784 = vunpack.c.l.s4 1983009808
      %v1785 = vunpack.c.0.s8 %v1784
      %v1786 = vlaneseq
      %v1787 = vshrl.u32 %v1786, 7
      %v1788 = vsub.s32 %v1785, %v1787
      %v1789 = vrot.slane %v1775, %v1788
      %v1790 = vcombine.low %v1766, %v1782
      %v1791 = vcombine.high %v1766, %v1782
      %v1793 = vunpack.c.l.s4 1934713408
      %v1794 = vunpack.c.0.s8 %v1793
      %v1795 = vlaneseq
      %v1796 = vshrl.u32 %v1795, 7
      %v1797 = vsub.s32 %v1794, %v1796
      %v1798 = vrot.slane %v1790, %v1797
      %v1800 = vunpack.c.l.s4 1934713408
      %v1801 = vunpack.c.0.s8 %v1800
      %v1802 = vlaneseq
      %v1803 = vshrl.u32 %v1802, 7
      %v1804 = vsub.s32 %v1801, %v1803
      %v1805 = vrot.slane %v1791, %v1804
      %v1806 = vcombine.low %v1773, %v1789
      %v1807 = vcombine.high %v1773, %v1789
      %v1809 = vunpack.c.l.s4 1934713408
      %v1810 = vunpack.c.0.s8 %v1809
      %v1811 = vlaneseq
      %v1812 = vshrl.u32 %v1811, 7
      %v1813 = vsub.s32 %v1810, %v1812
      %v1814 = vrot.slane %v1806, %v1813
      %v1816 = vunpack.c.l.s4 1934713408
      %v1817 = vunpack.c.0.s8 %v1816
      %v1818 = vlaneseq
      %v1819 = vshrl.u32 %v1818, 7
      %v1820 = vsub.s32 %v1817, %v1819
      %v1821 = vrot.slane %v1807, %v1820
      %v1822 = vcombine.high %v1798, 0.0
      %v1823 = vcombine.high %v1805, 0.0
      %v1824 = vcombine.high %v1814, 0.0
      %v1825 = vcombine.high %v1821, 0.0
      %v1826 = vcombine.low %v1798, %v1805
      %v1828 = vunpack.c.l.s4 1983009808
      %v1829 = vunpack.c.0.s8 %v1828
      %v1830 = vlaneseq
      %v1831 = vshrl.u32 %v1830, 7
      %v1832 = vsub.s32 %v1829, %v1831
      %v1833 = vrot.slane %v1826, %v1832
      %v1834 = vcombine.low %v1822, %v1823
      %v1836 = vunpack.c.l.s4 1983009808
      %v1837 = vunpack.c.0.s8 %v1836
      %v1838 = vlaneseq
      %v1839 = vshrl.u32 %v1838, 7
      %v1840 = vsub.s32 %v1837, %v1839
      %v1841 = vrot.slane %v1834, %v1840
      %v1842 = vcombine.low %v1814, %v1821
      %v1844 = vunpack.c.l.s4 1983009808
      %v1845 = vunpack.c.0.s8 %v1844
      %v1846 = vlaneseq
      %v1847 = vshrl.u32 %v1846, 7
      %v1848 = vsub.s32 %v1845, %v1847
      %v1849 = vrot.slane %v1842, %v1848
      %v1850 = vcombine.low %v1824, %v1825
      %v1852 = vunpack.c.l.s4 1983009808
      %v1853 = vunpack.c.0.s8 %v1852
      %v1854 = vlaneseq
      %v1855 = vshrl.u32 %v1854, 7
      %v1856 = vsub.s32 %v1853, %v1855
      %v1857 = vrot.slane %v1850, %v1856
      %v1858 = vcombine.low %v1833, %v1841
      %v1859 = vcombine.high %v1833, %v1841
      %v1861 = vunpack.c.l.s4 1934713408
      %v1862 = vunpack.c.0.s8 %v1861
      %v1863 = vlaneseq
      %v1864 = vshrl.u32 %v1863, 7
      %v1865 = vsub.s32 %v1862, %v1864
      %v1866 = vrot.slane %v1858, %v1865
      %v1868 = vunpack.c.l.s4 1934713408
      %v1869 = vunpack.c.0.s8 %v1868
      %v1870 = vlaneseq
      %v1871 = vshrl.u32 %v1870, 7
      %v1872 = vsub.s32 %v1869, %v1871
      %v1873 = vrot.slane %v1859, %v1872
      %v1874 = vcombine.low %v1849, %v1857
      %v1875 = vcombine.high %v1849, %v1857
      %v1877 = vunpack.c.l.s4 1934713408
      %v1878 = vunpack.c.0.s8 %v1877
      %v1879 = vlaneseq
      %v1880 = vshrl.u32 %v1879, 7
      %v1881 = vsub.s32 %v1878, %v1880
      %v1882 = vrot.slane %v1874, %v1881
      %v1884 = vunpack.c.l.s4 1934713408
      %v1885 = vunpack.c.0.s8 %v1884
      %v1886 = vlaneseq
      %v1887 = vshrl.u32 %v1886, 7
      %v1888 = vsub.s32 %v1885, %v1887
      %v1889 = vrot.slane %v1875, %v1888
      %v1890 = vcombine.low %v1866, %v1882
      %v1891 = vcombine.high %v1866, %v1882
      %v1892 = vcombine.low %v1873, %v1889
      %v1893 = vcombine.high %v1873, %v1889
      %1895 = vrot.lane.b32.xlu0 %v1891, 8
      %v1896 = vpop.permute.xlu0 %1895
      %1899 = vrot.lane.b32.xlu0 %v1892, 16
      %v1900 = vpop.permute.xlu0 %1899
      %1903 = vrot.lane.b32.xlu0 %v1893, 24
      %v1904 = vpop.permute.xlu0 %1903
      %v1906 = vsel %vm1270, %v1890, %v1896
      %vm1907 = vcmask 130048
      %v1908 = vsel %vm1907, %v1906, %v1900
      %vm1909 = vcmask 195584
      %v1910 = vsel %vm1909, %v1908, %v1904
      %v1911 = vpack.c.bf16 %v1910, %v1910
      %v1912 = vld [vmem:[%s5] sm:$0xf]
      %v1913 = vld [vmem:[%s5 + $0x4] sm:$0xf]
      %v1914 = vld [vmem:[%s5 + $0x8] sm:$0xf]
      %v1915 = vld [vmem:[%s5 + $0xc] sm:$0xf]
      %v1916 = vld [vmem:[%s6] sm:$0x1]
      %v1918 = vlaneseq
      %v1919 = vshrl.u32 %v1918, 7
      %v1920 = vsub.s32 0, %v1919
      %v1921 = vrot.slane %v1916, %v1920
      %v1927 = vunpack.c.l.b16 %v1912
      %v1928 = vunpack.c.l.b16 %v1913
      %v1929 = vunpack.c.l.b16 %v1914
      %v1930 = vunpack.c.l.b16 %v1915
      %v1931 = vpack.c.b16 %v1928, %v1927
      %v1932 = vpack.c.b16 %v1930, %v1929
      %v1936 = vsel %vm440, %v1911, 0
      %1938 = vmatprep.subr.bf16.mxu0 0
      %1939 = vmatpush1.bf16.msra.mxu0 %v1931
      %1940 = vmatprep.subr.bf16.mxu0 0
      %1941 = vmatpush1.bf16.msra.mxu0 %v1932
      %1942 = vmatprep.subr.bf16.mxu0 0
      %1943 = vmatpush1.bf16.msra.mxu0 0
      %1944 = vmatprep.subr.bf16.mxu0 0
      %1945 = vmatpush1.bf16.msra.mxu0 0
      %1946 = vmatprep.subr.bf16.mxu0 0
      %1947 = vmatpush1.bf16.msra.mxu0 0
      %1948 = vmatprep.subr.bf16.mxu0 0
      %1949 = vmatpush1.bf16.msra.mxu0 0
      %1950 = vmatprep.subr.bf16.mxu0 0
      %1951 = vmatpush1.bf16.msra.mxu0 0
      %1952 = vmatprep.subr.bf16.mxu0 0
      %1953 = vmatpush1.bf16.msra.mxu0 0
      %1954 = vmatprep.subr.bf16.mxu0 0
      %1955 = vmatpush1.bf16.msra.mxu0 0
      %1956 = vmatprep.subr.bf16.mxu0 0
      %1957 = vmatpush1.bf16.msra.mxu0 0
      %1958 = vmatprep.subr.bf16.mxu0 0
      %1959 = vmatpush1.bf16.msra.mxu0 0
      %1960 = vmatprep.subr.bf16.mxu0 0
      %1961 = vmatpush1.bf16.msra.mxu0 0
      %1962 = vmatprep.subr.bf16.mxu0 0
      %1963 = vmatpush1.bf16.msra.mxu0 0
      %1964 = vmatprep.subr.bf16.mxu0 0
      %1965 = vmatpush1.bf16.msra.mxu0 0
      %1966 = vmatprep.subr.bf16.mxu0 0
      %1967 = vmatpush1.bf16.msra.mxu0 0
      %1968 = vmatprep.subr.bf16.mxu0 0
      %1969 = vmatpush1.bf16.msra.mxu0 0
      %1970 = vmatprep.mubr.bf16.mxu0 0
      %1971 = vmatmul.mubr.bf16.gmra.mrb[0].mxu0 %v1936
      %v1972 = vpop.f32.mrb[0].mxu0
      %v1973 = vadd.f32 %v1921, %v1972
      %v1974 = vpop.f32.mrb[0].mxu0
      %v1975 = vpop.f32.mrb[0].mxu0
      %v1976 = vpop.f32.mrb[0].mxu0
      %1977 = vdwg.mxu0
      %v1978 = vadd.f32 %v437, %v1973
      %v1979 = vld [vmem:[%s7] sm:$0x1]
      %v1980 = vld [vmem:[%s8] sm:$0x1]
      %v1981 = vsel %vm440, %v1978, 0.0
      %1982 = vadd.xlane.f32.xlu0 %v1981
      %v1983 = vpop.xlane.xlu0 %1982
      %v1984 = vmul.f32 %v1983, %v444
      %v1985 = vsub.f32 %v1978, %v1984
      %v1986 = vmul.f32 %v1985, %v1985
      %v1987 = vsel %vm440, %v1986, 0.0
      %1988 = vadd.xlane.f32.xlu0 %v1987
      %v1989 = vpop.xlane.xlu0 %1988
      %v1990 = vmul.f32 %v1989, %v444
      %v1991 = vadd.f32 %v1990, 1e-05
      %v1992 = vrsqrt.pop %v1991
      %v1993 = vmul.f32 %v1985, %v1992
      %v1995 = vlaneseq
      %v1996 = vshrl.u32 %v1995, 7
      %v1997 = vsub.s32 0, %v1996
      %v1998 = vrot.slane %v1979, %v1997
      %v2000 = vmul.f32 %v1993, %v1998
      %v2002 = vlaneseq
      %v2003 = vshrl.u32 %v2002, 7
      %v2004 = vsub.s32 0, %v2003
      %v2005 = vrot.slane %v1980, %v2004
      %v2007 = vadd.f32 %v2000, %v2005
      %v2008 = vpack.c.bf16 %v2007, %v2007
      %v2009 = vld [vmem:[%s9] sm:$0xf]
      %v2010 = vld [vmem:[%s9 + $0x4] sm:$0xf]
      %v2011 = vld [vmem:[%s9 + $0x8] sm:$0xf]
      %v2012 = vld [vmem:[%s9 + $0xc] sm:$0xf]
      %v2013 = vld [vmem:[%s10] sm:$0x1]
      %v2015 = vlaneseq
      %v2016 = vshrl.u32 %v2015, 7
      %v2017 = vsub.s32 0, %v2016
      %v2018 = vrot.slane %v2013, %v2017
      %v2024 = vunpack.c.l.b16 %v2009
      %v2025 = vunpack.c.l.b16 %v2010
      %v2026 = vunpack.c.l.b16 %v2011
      %v2027 = vunpack.c.l.b16 %v2012
      %v2028 = vpack.c.b16 %v2025, %v2024
      %v2029 = vpack.c.b16 %v2027, %v2026
      %v2033 = vsel %vm440, %v2008, 0
      %2035 = vmatprep.subr.bf16.mxu0 0
      %2036 = vmatpush1.bf16.msra.mxu0 %v2028
      %2037 = vmatprep.subr.bf16.mxu0 0
      %2038 = vmatpush1.bf16.msra.mxu0 %v2029
      %2039 = vmatprep.subr.bf16.mxu0 0
      %2040 = vmatpush1.bf16.msra.mxu0 0
      %2041 = vmatprep.subr.bf16.mxu0 0
      %2042 = vmatpush1.bf16.msra.mxu0 0
      %2043 = vmatprep.subr.bf16.mxu0 0
      %2044 = vmatpush1.bf16.msra.mxu0 0
      %2045 = vmatprep.subr.bf16.mxu0 0
      %2046 = vmatpush1.bf16.msra.mxu0 0
      %2047 = vmatprep.subr.bf16.mxu0 0
      %2048 = vmatpush1.bf16.msra.mxu0 0
      %2049 = vmatprep.subr.bf16.mxu0 0
      %2050 = vmatpush1.bf16.msra.mxu0 0
      %2051 = vmatprep.subr.bf16.mxu0 0
      %2052 = vmatpush1.bf16.msra.mxu0 0
      %2053 = vmatprep.subr.bf16.mxu0 0
      %2054 = vmatpush1.bf16.msra.mxu0 0
      %2055 = vmatprep.subr.bf16.mxu0 0
      %2056 = vmatpush1.bf16.msra.mxu0 0
      %2057 = vmatprep.subr.bf16.mxu0 0
      %2058 = vmatpush1.bf16.msra.mxu0 0
      %2059 = vmatprep.subr.bf16.mxu0 0
      %2060 = vmatpush1.bf16.msra.mxu0 0
      %2061 = vmatprep.subr.bf16.mxu0 0
      %2062 = vmatpush1.bf16.msra.mxu0 0
      %2063 = vmatprep.subr.bf16.mxu0 0
      %2064 = vmatpush1.bf16.msra.mxu0 0
      %2065 = vmatprep.subr.bf16.mxu0 0
      %2066 = vmatpush1.bf16.msra.mxu0 0
      %2067 = vmatprep.mubr.bf16.mxu0 0
      %2068 = vmatmul.mubr.bf16.gmra.mrb[0].mxu0 %v2033
      %v2069 = vpop.f32.mrb[0].mxu0
      %v2070 = vadd.f32 %v2018, %v2069
      %v2071 = vpop.f32.mrb[0].mxu0
      %v2072 = vpop.f32.mrb[0].mxu0
      %v2073 = vpop.f32.mrb[0].mxu0
      %2074 = vdwg.mxu0
      %v2075 = vmul.f32 %v2070, 1.702
      %v2076 = vxor.u32 %v2075, 2147483648
      %v2077 = vmul.f32 %v2076, 1.442695
      %v2078 = vpow.pop %v2077
      %v2079 = vadd.f32 %v2078, 1.0
      %v2080 = vrcp.pop %v2079
      %v2081 = vmul.f32 1.0, %v2080
      %v2082 = vmul.f32 %v2070, %v2081
      %v2083 = vpack.c.bf16 %v2082, %v2082
      %v2084 = vld [vmem:[%s11] sm:$0xf]
      %v2085 = vld [vmem:[%s11 + $0x4] sm:$0xf]
      %v2086 = vld [vmem:[%s11 + $0x8] sm:$0xf]
      %v2087 = vld [vmem:[%s11 + $0xc] sm:$0xf]
      %v2088 = vld [vmem:[%s11 + $0x10] sm:$0xf]
      %v2089 = vld [vmem:[%s11 + $0x14] sm:$0xf]
      %v2090 = vld [vmem:[%s11 + $0x18] sm:$0xf]
      %v2091 = vld [vmem:[%s11 + $0x1c] sm:$0xf]
      %v2092 = vld [vmem:[%s11 + $0x20] sm:$0xf]
      %v2093 = vld [vmem:[%s11 + $0x24] sm:$0xf]
      %v2094 = vld [vmem:[%s11 + $0x28] sm:$0xf]
      %v2095 = vld [vmem:[%s11 + $0x2c] sm:$0xf]
      %v2096 = vld [vmem:[%s11 + $0x30] sm:$0xf]
      %v2097 = vld [vmem:[%s11 + $0x34] sm:$0xf]
      %v2098 = vld [vmem:[%s11 + $0x38] sm:$0xf]
      %v2099 = vld [vmem:[%s11 + $0x3c] sm:$0xf]
      %v2100 = vld [vmem:[%s12] sm:$0x1]
      %v2102 = vlaneseq
      %v2103 = vshrl.u32 %v2102, 7
      %v2104 = vsub.s32 0, %v2103
      %v2105 = vrot.slane %v2100, %v2104
      %v2123 = vunpack.c.l.b16 %v2084
      %v2124 = vunpack.c.l.b16 %v2085
      %v2125 = vunpack.c.l.b16 %v2086
      %v2126 = vunpack.c.l.b16 %v2087
      %v2127 = vunpack.c.l.b16 %v2088
      %v2128 = vunpack.c.l.b16 %v2089
      %v2129 = vunpack.c.l.b16 %v2090
      %v2130 = vunpack.c.l.b16 %v2091
      %v2131 = vunpack.c.l.b16 %v2092
      %v2132 = vunpack.c.l.b16 %v2093
      %v2133 = vunpack.c.l.b16 %v2094
      %v2134 = vunpack.c.l.b16 %v2095
      %v2135 = vunpack.c.l.b16 %v2096
      %v2136 = vunpack.c.l.b16 %v2097
      %v2137 = vunpack.c.l.b16 %v2098
      %v2138 = vunpack.c.l.b16 %v2099
      %v2139 = vpack.c.b16 %v2124, %v2123
      %v2140 = vpack.c.b16 %v2126, %v2125
      %v2141 = vpack.c.b16 %v2128, %v2127
      %v2142 = vpack.c.b16 %v2130, %v2129
      %v2143 = vpack.c.b16 %v2132, %v2131
      %v2144 = vpack.c.b16 %v2134, %v2133
      %v2145 = vpack.c.b16 %v2136, %v2135
      %v2146 = vpack.c.b16 %v2138, %v2137
      %2155 = vmatprep.subr.bf16.mxu0 0
      %2156 = vmatpush1.bf16.msra.mxu0 %v2139
      %2157 = vmatprep.subr.bf16.mxu0 0
      %2158 = vmatpush1.bf16.msra.mxu0 %v2140
      %2159 = vmatprep.subr.bf16.mxu0 0
      %2160 = vmatpush1.bf16.msra.mxu0 %v2141
      %2161 = vmatprep.subr.bf16.mxu0 0
      %2162 = vmatpush1.bf16.msra.mxu0 %v2142
      %2163 = vmatprep.subr.bf16.mxu0 0
      %2164 = vmatpush1.bf16.msra.mxu0 %v2143
      %2165 = vmatprep.subr.bf16.mxu0 0
      %2166 = vmatpush1.bf16.msra.mxu0 %v2144
      %2167 = vmatprep.subr.bf16.mxu0 0
      %2168 = vmatpush1.bf16.msra.mxu0 %v2145
      %2169 = vmatprep.subr.bf16.mxu0 0
      %2170 = vmatpush1.bf16.msra.mxu0 %v2146
      %2171 = vmatprep.subr.bf16.mxu0 0
      %2172 = vmatpush1.bf16.msra.mxu0 0
      %2173 = vmatprep.subr.bf16.mxu0 0
      %2174 = vmatpush1.bf16.msra.mxu0 0
      %2175 = vmatprep.subr.bf16.mxu0 0
      %2176 = vmatpush1.bf16.msra.mxu0 0
      %2177 = vmatprep.subr.bf16.mxu0 0
      %2178 = vmatpush1.bf16.msra.mxu0 0
      %2179 = vmatprep.subr.bf16.mxu0 0
      %2180 = vmatpush1.bf16.msra.mxu0 0
      %2181 = vmatprep.subr.bf16.mxu0 0
      %2182 = vmatpush1.bf16.msra.mxu0 0
      %2183 = vmatprep.subr.bf16.mxu0 0
      %2184 = vmatpush1.bf16.msra.mxu0 0
      %2185 = vmatprep.subr.bf16.mxu0 0
      %2186 = vmatpush1.bf16.msra.mxu0 0
      %2187 = vmatprep.mubr.bf16.mxu0 0
      %2188 = vmatmul.mubr.bf16.gmra.mrb[0].mxu0 %v2083
      %v2189 = vpop.f32.mrb[0].mxu0
      %v2190 = vadd.f32 %v2105, %v2189
      %v2191 = vpop.f32.mrb[0].mxu0
      %v2192 = vpop.f32.mrb[0].mxu0
      %v2193 = vpop.f32.mrb[0].mxu0
      %2194 = vdwg.mxu0
      %v2195 = vadd.f32 %v1978, %v2190
      %2196 = vst.msk [vmem:[%s435] sm:$0xff] %vm440, %v2195
      %p2197 = scmp.lt.s32.totalorder %s24, 1
      %s2198 = scalar_select %p2197, %s24, 1
      %s2199 = smul.addr %s2198, 8
      %s2200 = scalar_lea.vmem %s13, %s2199
      // Predicated region
      $region73: #{residual_attention_block.1} parent=71 // pred_check
        %p2201 = pneg %p320
      $region74: #{residual_attention_block.1} parent=71 // pred_check_branch
        %2203 = sbr.rel (%p2201) target = $region76
      $region75: #{residual_attention_block.1} parent=71 // pred_region
        _
      $region76: #{residual_attention_block.1} parent=71 // pred_fallthru
        _
    $region72: #{residual_attention_block.1} parent=5 // pred_fallthru
      _
    %p2204 = scmp.le.s32.totalorder 2, %s19
    // Predicated region
    $region77: #{residual_attention_block.1} parent=5 // pred_check
      %p2205 = pneg %p2204
    $region78: #{residual_attention_block.1} parent=5 // pred_check_branch
      %2207 = sbr.rel (%p2205) target = $region80
    $region79: #{residual_attention_block.1} parent=5 // pred_region
      %s2208 = ssub.s32 %s19, 2
      // Predicated region
      $region81: #{residual_attention_block.1} parent=79 // pred_check
        %p2209 = pneg %p326
      $region82: #{residual_attention_block.1} parent=79 // pred_check_branch
        %2211 = sbr.rel (%p2209) target = $region84
      $region83: #{residual_attention_block.1} parent=79 // pred_region
        %p2212 = scmp.lt.s32.totalorder %s25, 1
        %s2213 = scalar_select %p2212, %s25, 1
        %s2214 = smul.addr %s2213, 8
        %s2215 = scalar_lea.vmem %s13, %s2214
      $region84: #{residual_attention_block.1} parent=79 // pred_fallthru
        _
    $region80: #{residual_attention_block.1} parent=5 // pred_fallthru
      _
  $region6: #{residual_attention_block.1} parent=0 // loop_footer
    %s23 = sadd.s32 1, %s19
  $region7: #{residual_attention_block.1} parent=0 // loop_footer_branch
    %18 = sbr.rel target = $region3
  $region8: #{residual_attention_block.1} parent=0 // loop_exit
    _

</llo_original>
